<compile_context>
chip_gen: v7x
topology: tpu7x:2x2x1
jax: 0.10.0
libtpu: 0.0.40
codegen_flags: <defaults>
</compile_context>

<pallas_src>
import jax
import jax.numpy as jnp
from jax.experimental import pallas as pl
from jax.experimental.pallas import tpu as pltpu

K_IN = 28 * 28          # 784 (kept unpadded; Mosaic masks the lane padding)
H1 = 512
H2 = 256
N_OUT = 10
N_OUT_PAD = 128         # lane-dense output width
NEG_BIG = -1e30         # padded-logit bias (must stay f32; bf16 would be -inf)


def _round_up(x, m):
    return ((x + m - 1) // m) * m


def _choose_tb(batch):
    """Batch tile: tiny -> one minimal step; mid -> 2 parallel steps (v7x);
    large -> big tiles to amortize ~0.35 us/step overhead."""
    b16 = _round_up(max(batch, 1), 16)
    if b16 < 32:
        return b16
    if b16 <= 2048:
        return _round_up(-(-b16 // 2), 16)   # exactly 2 grid steps
    return 1024


def _choose_strip(tb):
    """Sub-strip the tile for big tb to bound f32 intermediate live ranges."""
    if tb >= 512 and tb % 256 == 0:
        return 256
    return tb


def _make_kernel(strip, n_strips):
    def compute_strip(x, w1, b1, w2, b2, w3, b3):
        # fc1 + ReLU (bf16 operands, f32 accumulation)
        h1 = jnp.dot(x, w1, preferred_element_type=jnp.float32)
        h1 = jnp.maximum(h1 + b1, 0.0).astype(jnp.bfloat16)
        # fc2 + ReLU
        h2 = jnp.dot(h1, w2, preferred_element_type=jnp.float32)
        h2 = jnp.maximum(h2 + b2, 0.0).astype(jnp.bfloat16)
        # fc3 (output lane-padded to 128; padded columns get bias -1e30)
        logits = jnp.dot(h2, w3, preferred_element_type=jnp.float32) + b3
        # log_softmax over the padded lane dim; padded columns -> exp() == 0
        m = jnp.max(logits, axis=1, keepdims=True)
        shifted = logits - m
        lse = jnp.log(jnp.sum(jnp.exp(shifted), axis=1, keepdims=True))
        return shifted - lse

    def mlp_kernel(x_ref, w1_ref, b1_ref, w2_ref, b2_ref, w3_ref, b3_ref, o_ref):
        # Hoist the (VMEM-resident) weight/bias loads out of the strip loop.
        w1 = w1_ref[...]
        b1 = b1_ref[...]
        w2 = w2_ref[...]
        b2 = b2_ref[...]
        w3 = w3_ref[...]
        b3 = b3_ref[...]
        if n_strips == 1:
            o_ref[...] = compute_strip(x_ref[...], w1, b1, w2, b2, w3, b3)
        else:
            def body(s, carry):
                r0 = pl.multiple_of(s * strip, strip)
                xs = x_ref[pl.ds(r0, strip), :]
                o_ref[pl.ds(r0, strip), :] = compute_strip(
                    xs, w1, b1, w2, b2, w3, b3)
                return carry
            jax.lax.fori_loop(0, n_strips, body, 0, unroll=True)

    return mlp_kernel


def prepare_params(params):
    """One-time preprocessing: bf16 matmul operands, lane-padded fc3, f32 biases.
    Call once at init; do NOT redo per forward call."""
    w1, b1, w2, b2, w3, b3 = params
    w1_b = w1.astype(jnp.bfloat16)                     # (784, 512), no K padding
    w2_b = w2.astype(jnp.bfloat16)                     # (512, 256)
    w3_p = jnp.zeros((H2, N_OUT_PAD), jnp.bfloat16).at[:, :N_OUT].set(
        w3.astype(jnp.bfloat16))                       # (256, 128)
    b1_f = b1.astype(jnp.float32).reshape(1, H1)
    b2_f = b2.astype(jnp.float32).reshape(1, H2)
    # Padded logit lanes get a huge negative bias; keep in f32 (bf16 -> -inf).
    b3_p = jnp.full((1, N_OUT_PAD), NEG_BIG, jnp.float32).at[:, :N_OUT].set(
        b3.astype(jnp.float32).reshape(1, N_OUT))
    return (w1_b, b1_f, w2_b, b2_f, w3_p, b3_p)


def mlp_forward(x_nchw, prepared_params, *, tb=None, strip=None):
    """x_nchw: (B, 1, 28, 28) float; prepared_params from prepare_params()."""
    w1_b, b1_f, w2_b, b2_f, w3_p, b3_p = prepared_params
    B = x_nchw.shape[0]

    # Flatten (== x.view(-1, 784)); bf16 matmul operand. Pad only the batch dim.
    x2d = x_nchw.reshape(B, K_IN).astype(jnp.bfloat16)

    if tb is None:
        tb = _choose_tb(B)
    b_pad = _round_up(B, tb)
    if b_pad != B:
        x2d = jnp.pad(x2d, ((0, b_pad - B), (0, 0)))

    if strip is None:
        strip = _choose_strip(tb)
    assert tb % strip == 0
    n_strips = tb // strip
    kernel = _make_kernel(strip, n_strips)

    grid = (b_pad // tb,)
    out = pl.pallas_call(
        kernel,
        out_shape=jax.ShapeDtypeStruct((b_pad, N_OUT_PAD), jnp.float32),
        grid=grid,
        in_specs=[
            pl.BlockSpec((tb, K_IN), lambda i: (i, 0)),        # x tile (pipelined)
            pl.BlockSpec((K_IN, H1), lambda i: (0, 0)),        # w1 (VMEM-resident)
            pl.BlockSpec((1, H1), lambda i: (0, 0)),           # b1
            pl.BlockSpec((H1, H2), lambda i: (0, 0)),          # w2
            pl.BlockSpec((1, H2), lambda i: (0, 0)),           # b2
            pl.BlockSpec((H2, N_OUT_PAD), lambda i: (0, 0)),   # w3 (lane-padded)
            pl.BlockSpec((1, N_OUT_PAD), lambda i: (0, 0)),    # b3 (lane-padded)
        ],
        out_specs=pl.BlockSpec((tb, N_OUT_PAD), lambda i: (i, 0)),
        compiler_params=pltpu.CompilerParams(
            dimension_semantics=("parallel",),      # shard batch steps over TCs
            vmem_limit_bytes=48 << 20,              # safe on v7x (64 MiB/TC)
        ),
    )(x2d, w1_b, b1_f, w2_b, b2_f, w3_p, b3_p)

    # Strip batch padding and the padded logit lanes.
    return out[:B, :N_OUT]


def init_params(key):
    # Deterministic synthetic init (torch-Linear-like uniform fan-in scaling).
    # Stored as (in, out) so the kernel computes y = x @ W + b.
    dims = [(K_IN, H1), (H1, H2), (H2, N_OUT)]
    params = []
    for d_in, d_out in dims:
        key, kw, kb = jax.random.split(key, 3)
        bound = 1.0 / jnp.sqrt(d_in)
        w = jax.random.uniform(kw, (d_in, d_out), jnp.float32, -bound, bound)
        b = jax.random.uniform(kb, (1, d_out), jnp.float32, -bound, bound)
        params += [w, b]
    return tuple(params)


def reference_forward(x_nchw, params):
    # Pure f32 reference matching the PyTorch module semantics.
    w1, b1, w2, b2, w3, b3 = params
    x = x_nchw.reshape(x_nchw.shape[0], -1).astype(jnp.float32)
    h1 = jax.nn.relu(x @ w1 + b1)
    h2 = jax.nn.relu(h1 @ w2 + b2)
    logits = h2 @ w3 + b3
    return jax.nn.log_softmax(logits, axis=1)


def _check(out, ref, B):
    assert out.shape == (B, N_OUT)
    assert bool(jnp.all(jnp.isfinite(out))), "non-finite output"
    # bf16 matmul operands with f32 accumulation -> loose tolerance vs f32 ref
    assert jnp.allclose(out, ref, atol=2e-2, rtol=2e-2), "mismatch vs reference"


if __name__ == "__main__":
    key = jax.random.PRNGKey(0)
    kx, kx2, kp = jax.random.split(key, 3)
    params = init_params(kp)
    prepared = prepare_params(params)          # one-time weight preprocessing

    # Case 1: small inference batch (single small tile, single strip).
    x = jax.random.normal(kx, (8, 1, 28, 28), dtype=jnp.float32)
    out = jax.block_until_ready(mlp_forward(x, prepared))
    _check(out, reference_forward(x, params), 8)

    # Case 2: exercise multi-step grid (batch padding) + sub-strip loop path
    # at small shapes via explicit tb/strip overrides.
    x2 = jax.random.normal(kx2, (40, 1, 28, 28), dtype=jnp.float32)
    out2 = jax.block_until_ready(mlp_forward(x2, prepared, tb=32, strip=16))
    _check(out2, reference_forward(x2, params), 40)

    print("KERNEL_OK")
</pallas_src>

<mosaic_0001>
module attributes {stable_mosaic.version = 11 : i64} {
  func.func @mlp_kernel(%arg0: i32, %arg1: memref<16x784xbf16, #tpu.memory_space<vmem>>, %arg2: memref<784x512xbf16, #tpu.memory_space<vmem>>, %arg3: memref<1x512xf32, #tpu.memory_space<vmem>>, %arg4: memref<512x256xbf16, #tpu.memory_space<vmem>>, %arg5: memref<1x256xf32, #tpu.memory_space<vmem>>, %arg6: memref<256x128xbf16, #tpu.memory_space<vmem>>, %arg7: memref<1x128xf32, #tpu.memory_space<vmem>>, %arg8: memref<16x128xf32, #tpu.memory_space<vmem>>) attributes {dimension_semantics = [#tpu.dimension_semantics<parallel>], iteration_bounds = array<i64: 1>, scalar_prefetch = 0 : i64, scratch_operands = 0 : i64, tpu.core_type = #tpu.core_type<tc>, window_params = [{transform_indices = @transform_0, window_bounds = array<i64: 16, 784>}, {pipeline_mode = #tpu.pipeline_mode<synchronous>, transform_indices = @transform_1, window_bounds = array<i64: 784, 512>}, {pipeline_mode = #tpu.pipeline_mode<synchronous>, transform_indices = @transform_2, window_bounds = array<i64: 1, 512>}, {pipeline_mode = #tpu.pipeline_mode<synchronous>, transform_indices = @transform_3, window_bounds = array<i64: 512, 256>}, {pipeline_mode = #tpu.pipeline_mode<synchronous>, transform_indices = @transform_4, window_bounds = array<i64: 1, 256>}, {pipeline_mode = #tpu.pipeline_mode<synchronous>, transform_indices = @transform_5, window_bounds = array<i64: 256, 128>}, {pipeline_mode = #tpu.pipeline_mode<synchronous>, transform_indices = @transform_6, window_bounds = array<i64: 1, 128>}, {transform_indices = @transform_7, window_bounds = array<i64: 16, 128>}]} {
    %c0 = arith.constant 0 : index
    %c0_0 = arith.constant 0 : index
    %0 = vector.load %arg2[%c0, %c0_0] : memref<784x512xbf16, #tpu.memory_space<vmem>>, vector<784x512xbf16>
    %c0_1 = arith.constant 0 : index
    %c0_2 = arith.constant 0 : index
    %1 = vector.load %arg3[%c0_1, %c0_2] : memref<1x512xf32, #tpu.memory_space<vmem>>, vector<1x512xf32>
    %c0_3 = arith.constant 0 : index
    %c0_4 = arith.constant 0 : index
    %2 = vector.load %arg4[%c0_3, %c0_4] : memref<512x256xbf16, #tpu.memory_space<vmem>>, vector<512x256xbf16>
    %c0_5 = arith.constant 0 : index
    %c0_6 = arith.constant 0 : index
    %3 = vector.load %arg5[%c0_5, %c0_6] : memref<1x256xf32, #tpu.memory_space<vmem>>, vector<1x256xf32>
    %c0_7 = arith.constant 0 : index
    %c0_8 = arith.constant 0 : index
    %4 = vector.load %arg6[%c0_7, %c0_8] : memref<256x128xbf16, #tpu.memory_space<vmem>>, vector<256x128xbf16>
    %c0_9 = arith.constant 0 : index
    %c0_10 = arith.constant 0 : index
    %5 = vector.load %arg7[%c0_9, %c0_10] : memref<1x128xf32, #tpu.memory_space<vmem>>, vector<1x128xf32>
    %c0_11 = arith.constant 0 : index
    %c0_12 = arith.constant 0 : index
    %6 = vector.load %arg1[%c0_11, %c0_12] : memref<16x784xbf16, #tpu.memory_space<vmem>>, vector<16x784xbf16>
    %cst = arith.constant dense<0.000000e+00> : vector<16x512xf32>
    %7 = tpu.matmul %6, %0, %cst {dimension_numbers = #tpu.dot_dimension_numbers<[1], [0], [0], [1], [0, 0, 1, 1], [], []>} : vector<16x784xbf16>, vector<784x512xbf16>, vector<16x512xf32> -> vector<16x512xf32>
    %8 = vector.broadcast %1 : vector<1x512xf32> to vector<16x512xf32>
    %9 = arith.addf %7, %8 : vector<16x512xf32>
    %cst_13 = arith.constant 0.000000e+00 : f32
    %10 = vector.broadcast %cst_13 : f32 to vector<16x512xf32>
    %11 = arith.maximumf %9, %10 : vector<16x512xf32>
    %12 = arith.truncf %11 : vector<16x512xf32> to vector<16x512xbf16>
    %cst_14 = arith.constant dense<0.000000e+00> : vector<16x256xf32>
    %13 = tpu.matmul %12, %2, %cst_14 {dimension_numbers = #tpu.dot_dimension_numbers<[1], [0], [0], [1], [0, 0, 1, 1], [], []>} : vector<16x512xbf16>, vector<512x256xbf16>, vector<16x256xf32> -> vector<16x256xf32>
    %14 = vector.broadcast %3 : vector<1x256xf32> to vector<16x256xf32>
    %15 = arith.addf %13, %14 : vector<16x256xf32>
    %cst_15 = arith.constant 0.000000e+00 : f32
    %16 = vector.broadcast %cst_15 : f32 to vector<16x256xf32>
    %17 = arith.maximumf %15, %16 : vector<16x256xf32>
    %18 = arith.truncf %17 : vector<16x256xf32> to vector<16x256xbf16>
    %cst_16 = arith.constant dense<0.000000e+00> : vector<16x128xf32>
    %19 = tpu.matmul %18, %4, %cst_16 {dimension_numbers = #tpu.dot_dimension_numbers<[1], [0], [0], [1], [0, 0, 1, 1], [], []>} : vector<16x256xbf16>, vector<256x128xbf16>, vector<16x128xf32> -> vector<16x128xf32>
    %20 = vector.broadcast %5 : vector<1x128xf32> to vector<16x128xf32>
    %21 = arith.addf %19, %20 : vector<16x128xf32>
    %cst_17 = arith.constant dense<0xFF800000> : vector<16xf32>
    %22 = vector.multi_reduction <maximumf>, %21, %cst_17 [1] : vector<16x128xf32> to vector<16xf32>
    %23 = vector.shape_cast %22 : vector<16xf32> to vector<16x1xf32>
    %24 = vector.broadcast %23 : vector<16x1xf32> to vector<16x128xf32>
    %25 = arith.subf %21, %24 : vector<16x128xf32>
    %26 = math.exp %25 : vector<16x128xf32>
    %cst_18 = arith.constant dense<0.000000e+00> : vector<16xf32>
    %27 = vector.multi_reduction <add>, %26, %cst_18 [1] : vector<16x128xf32> to vector<16xf32>
    %28 = vector.shape_cast %27 : vector<16xf32> to vector<16x1xf32>
    %29 = math.log %28 : vector<16x1xf32>
    %30 = vector.broadcast %29 : vector<16x1xf32> to vector<16x128xf32>
    %31 = arith.subf %25, %30 : vector<16x128xf32>
    %c0_19 = arith.constant 0 : index
    %c0_20 = arith.constant 0 : index
    %32 = vector.load %arg8[%c0_19, %c0_20] : memref<16x128xf32, #tpu.memory_space<vmem>>, vector<16x128xf32>
    tpu.vector_store %arg8[%c0_19, %c0_20], %31 {strides = array<i32>} : memref<16x128xf32, #tpu.memory_space<vmem>>, vector<16x128xf32>,
    return
  }
  func.func @transform_0(%arg0: i32) -> (i32, i32) {
    %c0_i32 = arith.constant 0 : i32
    %c0_i32_0 = arith.constant 0 : i32
    return %arg0, %c0_i32 : i32, i32
  }
  func.func @transform_1(%arg0: i32) -> (i32, i32) {
    %c0_i32 = arith.constant 0 : i32
    %c0_i32_0 = arith.constant 0 : i32
    %c0_i32_1 = arith.constant 0 : i32
    return %c0_i32, %c0_i32_0 : i32, i32
  }
  func.func @transform_2(%arg0: i32) -> (i32, i32) {
    %c0_i32 = arith.constant 0 : i32
    %c0_i32_0 = arith.constant 0 : i32
    %c0_i32_1 = arith.constant 0 : i32
    return %c0_i32, %c0_i32_0 : i32, i32
  }
  func.func @transform_3(%arg0: i32) -> (i32, i32) {
    %c0_i32 = arith.constant 0 : i32
    %c0_i32_0 = arith.constant 0 : i32
    %c0_i32_1 = arith.constant 0 : i32
    return %c0_i32, %c0_i32_0 : i32, i32
  }
  func.func @transform_4(%arg0: i32) -> (i32, i32) {
    %c0_i32 = arith.constant 0 : i32
    %c0_i32_0 = arith.constant 0 : i32
    %c0_i32_1 = arith.constant 0 : i32
    return %c0_i32, %c0_i32_0 : i32, i32
  }
  func.func @transform_5(%arg0: i32) -> (i32, i32) {
    %c0_i32 = arith.constant 0 : i32
    %c0_i32_0 = arith.constant 0 : i32
    %c0_i32_1 = arith.constant 0 : i32
    return %c0_i32, %c0_i32_0 : i32, i32
  }
  func.func @transform_6(%arg0: i32) -> (i32, i32) {
    %c0_i32 = arith.constant 0 : i32
    %c0_i32_0 = arith.constant 0 : i32
    %c0_i32_1 = arith.constant 0 : i32
    return %c0_i32, %c0_i32_0 : i32, i32
  }
  func.func @transform_7(%arg0: i32) -> (i32, i32) {
    %c0_i32 = arith.constant 0 : i32
    %c0_i32_0 = arith.constant 0 : i32
    return %arg0, %c0_i32 : i32, i32
  }
}

</mosaic_0001>

<llo_original>
// kernel: tpu_custom_call.1
$region0: #{tpu_custom_call.1}
  #allocation0 [shape = 'u32[]', space=smem, size = 0x4, offset = 0x4, fixed_abs, tag = 'smem constant byte address 0x4 - core index']
  #allocation1 [shape = 'u32[144,128]{1,0:T(1,128)}', space=vmem, size = 0x12000, scoped, tag = 'internal scratch']
  %s0 = inlined_call_operand.hbm [shape: bf16[16,784], index: 0, kind: input, shape index: {}]
  %s1 = inlined_call_operand.hbm [shape: bf16[784,512], index: 1, kind: input, shape index: {}]
  %s2 = inlined_call_operand.vmem [shape: f32[1,512], index: 2, kind: input, shape index: {}]
  %s3 = inlined_call_operand.hbm [shape: bf16[512,256], index: 3, kind: input, shape index: {}]
  %s4 = inlined_call_operand.vmem [shape: f32[1,256], index: 4, kind: input, shape index: {}]
  %s5 = inlined_call_operand.hbm [shape: bf16[256,128], index: 5, kind: input, shape index: {}]
  %s6 = inlined_call_operand.vmem [shape: f32[1,128], index: 6, kind: input, shape index: {}]
  %s7 = inlined_call_operand.hbm [shape: f32[16,128], index: 7, kind: output, shape index: {}]
  %s8 = sld [smem:[#allocation0]]
  $region54: #{tpu_custom_call.1} parent=0
    _
  %s10 = ssub.s32 1, %s8
  %s11 = scalar_select 0, %s10, %s8
  $region1: #{tpu_custom_call.1} parent=0
    #allocation2 [shape = 'u8[28672]{0}', space=vmem, size = 0x7000, scoped, tag = 'input window, operand 0, single buffered']
    #allocation3 [shape = 's32[1]{0}', space=sflag, size = 0x4, scoped, tag = 'scoped memory for tpu_custom_call.1']
    #allocation4 [shape = 's32[1]{0}', space=sflag, size = 0x4, scoped, tag = 'scoped memory for tpu_custom_call.1']
    #allocation5 [shape = 'u8[802816]{0}', space=vmem, size = 0xc4000, scoped, tag = 'input window, operand 1, single buffered']
    #allocation6 [shape = 's32[1]{0}', space=sflag, size = 0x4, scoped, tag = 'scoped memory for tpu_custom_call.1']
    #allocation7 [shape = 'u8[262144]{0}', space=vmem, size = 0x40000, scoped, tag = 'input window, operand 3, single buffered']
    #allocation8 [shape = 'u8[65536]{0}', space=vmem, size = 0x10000, scoped, tag = 'input window, operand 5, single buffered']
    #allocation9 [shape = 's32[1]{0}', space=sflag, size = 0x4, scoped, tag = 'scoped memory for tpu_custom_call.1']
    #allocation10 [shape = 'u8[8192]{0}', space=vmem, size = 0x2000, scoped, tag = 'output window, operand 0, single buffered']
    %12 = vsyncpa [#allocation3], 0
    %13 = vsyncpa [#allocation6], 0
    %14 = vsyncpa [#allocation9], 0
    %15 = vsyncpa [#allocation4], 0
    // Predicated region
    $region2: #{tpu_custom_call.1} parent=1 // pred_check
      _
    $region3: #{tpu_custom_call.1} parent=1 // pred_check_branch
      %17 = sbr.rel (0) target = $region5
    $region4: #{tpu_custom_call.1} parent=1 // pred_region
      %s19 = ssub.s32 896, 896
      %20 = vsyncadd [#allocation3], %s19
      %s21 = sshll.u32 [#allocation2], 4
      %s22 = int_to_ptr.vmem [resolvable:$true] %s21
      %27 = dma.hbm_to_vmem [thread:$0]  %s0, 896, %s22, [#allocation3], 448, 448, 28
    $region5: #{tpu_custom_call.1} parent=1 // pred_fallthru
      _
    // Predicated region
    $region6: #{tpu_custom_call.1} parent=1 // pred_check
      _
    $region7: #{tpu_custom_call.1} parent=1 // pred_check_branch
      %29 = sbr.rel (0) target = $region9
    $region8: #{tpu_custom_call.1} parent=1 // pred_region
      %s31 = ssub.s32 25088, 25088
      %32 = vsyncadd [#allocation6], %s31
      %s33 = sshll.u32 [#allocation5], 4
      %s34 = int_to_ptr.vmem [resolvable:$true] %s33
      %39 = dma.hbm_to_vmem [thread:$0]  %s1, 25088, %s34, [#allocation6], 256, 256, 16
    $region9: #{tpu_custom_call.1} parent=1 // pred_fallthru
      _
    // Predicated region
    $region10: #{tpu_custom_call.1} parent=1 // pred_check
      _
    $region11: #{tpu_custom_call.1} parent=1 // pred_check_branch
      %41 = sbr.rel (0) target = $region13
    $region12: #{tpu_custom_call.1} parent=1 // pred_region
      _
    $region13: #{tpu_custom_call.1} parent=1 // pred_fallthru
      _
    // Predicated region
    $region14: #{tpu_custom_call.1} parent=1 // pred_check
      _
    $region15: #{tpu_custom_call.1} parent=1 // pred_check_branch
      %43 = sbr.rel (0) target = $region17
    $region16: #{tpu_custom_call.1} parent=1 // pred_region
      %s45 = ssub.s32 8192, 8192
      %46 = vsyncadd [#allocation6], %s45
      %s47 = sshll.u32 [#allocation7], 4
      %s48 = int_to_ptr.vmem [resolvable:$true] %s47
      %53 = dma.hbm_to_vmem [thread:$0]  %s3, 8192, %s48, [#allocation6], 128, 128, 8
    $region17: #{tpu_custom_call.1} parent=1 // pred_fallthru
      _
    // Predicated region
    $region18: #{tpu_custom_call.1} parent=1 // pred_check
      _
    $region19: #{tpu_custom_call.1} parent=1 // pred_check_branch
      %55 = sbr.rel (0) target = $region21
    $region20: #{tpu_custom_call.1} parent=1 // pred_region
      _
    $region21: #{tpu_custom_call.1} parent=1 // pred_fallthru
      _
    // Predicated region
    $region22: #{tpu_custom_call.1} parent=1 // pred_check
      _
    $region23: #{tpu_custom_call.1} parent=1 // pred_check_branch
      %57 = sbr.rel (0) target = $region25
    $region24: #{tpu_custom_call.1} parent=1 // pred_region
      %s59 = ssub.s32 2048, 2048
      %60 = vsyncadd [#allocation9], %s59
      %s61 = sshll.u32 [#allocation8], 4
      %s62 = int_to_ptr.vmem [resolvable:$true] %s61
      %67 = dma.hbm_to_vmem [thread:$0]  %s5, 2048, %s62, [#allocation9], 64, 64, 4
    $region25: #{tpu_custom_call.1} parent=1 // pred_fallthru
      _
    // Predicated region
    $region26: #{tpu_custom_call.1} parent=1 // pred_check
      _
    $region27: #{tpu_custom_call.1} parent=1 // pred_check_branch
      %69 = sbr.rel (0) target = $region29
    $region28: #{tpu_custom_call.1} parent=1 // pred_region
      _
    $region29: #{tpu_custom_call.1} parent=1 // pred_fallthru
      _
    // Predicated region
    $region30: #{tpu_custom_call.1} parent=1 // pred_check
      _
    $region31: #{tpu_custom_call.1} parent=1 // pred_check_branch
      %71 = sbr.rel (0) target = $region33
    $region32: #{tpu_custom_call.1} parent=1 // pred_region
      %72 = dma.done [#allocation3], 896
    $region33: #{tpu_custom_call.1} parent=1 // pred_fallthru
      _
    // Predicated region
    $region34: #{tpu_custom_call.1} parent=1 // pred_check
      _
    $region35: #{tpu_custom_call.1} parent=1 // pred_check_branch
      %74 = sbr.rel (0) target = $region37
    $region36: #{tpu_custom_call.1} parent=1 // pred_region
      %75 = dma.done [#allocation6], 25088
    $region37: #{tpu_custom_call.1} parent=1 // pred_fallthru
      _
    // Predicated region
    $region38: #{tpu_custom_call.1} parent=1 // pred_check
      _
    $region39: #{tpu_custom_call.1} parent=1 // pred_check_branch
      %77 = sbr.rel (0) target = $region41
    $region40: #{tpu_custom_call.1} parent=1 // pred_region
      %78 = dma.done [#allocation6], 8192
    $region41: #{tpu_custom_call.1} parent=1 // pred_fallthru
      _
    // Predicated region
    $region42: #{tpu_custom_call.1} parent=1 // pred_check
      _
    $region43: #{tpu_custom_call.1} parent=1 // pred_check_branch
      %80 = sbr.rel (0) target = $region45
    $region44: #{tpu_custom_call.1} parent=1 // pred_region
      %81 = dma.done [#allocation9], 2048
    $region45: #{tpu_custom_call.1} parent=1 // pred_fallthru
      _
    %v83 = vld [vmem:[#allocation5] sm:$0xff]
    %v84 = vld [vmem:[#allocation5 + $0x8] sm:$0xff]
    %v85 = vld [vmem:[#allocation5 + $0x10] sm:$0xff]
    %v86 = vld [vmem:[#allocation5 + $0x18] sm:$0xff]
    %v87 = vld [vmem:[#allocation5 + $0x20] sm:$0xff]
    %v88 = vld [vmem:[#allocation5 + $0x28] sm:$0xff]
    %v89 = vld [vmem:[#allocation5 + $0x30] sm:$0xff]
    %v90 = vld [vmem:[#allocation5 + $0x38] sm:$0xff]
    %v91 = vld [vmem:[#allocation5 + $0x40] sm:$0xff]
    %v92 = vld [vmem:[#allocation5 + $0x48] sm:$0xff]
    %v93 = vld [vmem:[#allocation5 + $0x50] sm:$0xff]
    %v94 = vld [vmem:[#allocation5 + $0x58] sm:$0xff]
    %v95 = vld [vmem:[#allocation5 + $0x60] sm:$0xff]
    %v96 = vld [vmem:[#allocation5 + $0x68] sm:$0xff]
    %v97 = vld [vmem:[#allocation5 + $0x70] sm:$0xff]
    %v98 = vld [vmem:[#allocation5 + $0x78] sm:$0xff]
    %v99 = vld [vmem:[#allocation5 + $0x80] sm:$0xff]
    %v100 = vld [vmem:[#allocation5 + $0x88] sm:$0xff]
    %v101 = vld [vmem:[#allocation5 + $0x90] sm:$0xff]
    %v102 = vld [vmem:[#allocation5 + $0x98] sm:$0xff]
    %v103 = vld [vmem:[#allocation5 + $0xa0] sm:$0xff]
    %v104 = vld [vmem:[#allocation5 + $0xa8] sm:$0xff]
    %v105 = vld [vmem:[#allocation5 + $0xb0] sm:$0xff]
    %v106 = vld [vmem:[#allocation5 + $0xb8] sm:$0xff]
    %v107 = vld [vmem:[#allocation5 + $0xc0] sm:$0xff]
    %v108 = vld [vmem:[#allocation5 + $0xc8] sm:$0xff]
    %v109 = vld [vmem:[#allocation5 + $0xd0] sm:$0xff]
    %v110 = vld [vmem:[#allocation5 + $0xd8] sm:$0xff]
    %v111 = vld [vmem:[#allocation5 + $0xe0] sm:$0xff]
    %v112 = vld [vmem:[#allocation5 + $0xe8] sm:$0xff]
    %v113 = vld [vmem:[#allocation5 + $0xf0] sm:$0xff]
    %v114 = vld [vmem:[#allocation5 + $0xf8] sm:$0xff]
    %v115 = vld [vmem:[#allocation5 + $0x100] sm:$0xff]
    %v116 = vld [vmem:[#allocation5 + $0x108] sm:$0xff]
    %v117 = vld [vmem:[#allocation5 + $0x110] sm:$0xff]
    %v118 = vld [vmem:[#allocation5 + $0x118] sm:$0xff]
    %v119 = vld [vmem:[#allocation5 + $0x120] sm:$0xff]
    %v120 = vld [vmem:[#allocation5 + $0x128] sm:$0xff]
    %v121 = vld [vmem:[#allocation5 + $0x130] sm:$0xff]
    %v122 = vld [vmem:[#allocation5 + $0x138] sm:$0xff]
    %v123 = vld [vmem:[#allocation5 + $0x140] sm:$0xff]
    %v124 = vld [vmem:[#allocation5 + $0x148] sm:$0xff]
    %v125 = vld [vmem:[#allocation5 + $0x150] sm:$0xff]
    %v126 = vld [vmem:[#allocation5 + $0x158] sm:$0xff]
    %v127 = vld [vmem:[#allocation5 + $0x160] sm:$0xff]
    %v128 = vld [vmem:[#allocation5 + $0x168] sm:$0xff]
    %v129 = vld [vmem:[#allocation5 + $0x170] sm:$0xff]
    %v130 = vld [vmem:[#allocation5 + $0x178] sm:$0xff]
    %v131 = vld [vmem:[#allocation5 + $0x180] sm:$0xff]
    %v132 = vld [vmem:[#allocation5 + $0x188] sm:$0xff]
    %v133 = vld [vmem:[#allocation5 + $0x190] sm:$0xff]
    %v134 = vld [vmem:[#allocation5 + $0x198] sm:$0xff]
    %v135 = vld [vmem:[#allocation5 + $0x1a0] sm:$0xff]
    %v136 = vld [vmem:[#allocation5 + $0x1a8] sm:$0xff]
    %v137 = vld [vmem:[#allocation5 + $0x1b0] sm:$0xff]
    %v138 = vld [vmem:[#allocation5 + $0x1b8] sm:$0xff]
    %v139 = vld [vmem:[#allocation5 + $0x1c0] sm:$0xff]
    %v140 = vld [vmem:[#allocation5 + $0x1c8] sm:$0xff]
    %v141 = vld [vmem:[#allocation5 + $0x1d0] sm:$0xff]
    %v142 = vld [vmem:[#allocation5 + $0x1d8] sm:$0xff]
    %v143 = vld [vmem:[#allocation5 + $0x1e0] sm:$0xff]
    %v144 = vld [vmem:[#allocation5 + $0x1e8] sm:$0xff]
    %v145 = vld [vmem:[#allocation5 + $0x1f0] sm:$0xff]
    %v146 = vld [vmem:[#allocation5 + $0x1f8] sm:$0xff]
    %v147 = vld [vmem:[#allocation5 + $0x200] sm:$0xff]
    %v148 = vld [vmem:[#allocation5 + $0x208] sm:$0xff]
    %v149 = vld [vmem:[#allocation5 + $0x210] sm:$0xff]
    %v150 = vld [vmem:[#allocation5 + $0x218] sm:$0xff]
    %v151 = vld [vmem:[#allocation5 + $0x220] sm:$0xff]
    %v152 = vld [vmem:[#allocation5 + $0x228] sm:$0xff]
    %v153 = vld [vmem:[#allocation5 + $0x230] sm:$0xff]
    %v154 = vld [vmem:[#allocation5 + $0x238] sm:$0xff]
    %v155 = vld [vmem:[#allocation5 + $0x240] sm:$0xff]
    %v156 = vld [vmem:[#allocation5 + $0x248] sm:$0xff]
    %v157 = vld [vmem:[#allocation5 + $0x250] sm:$0xff]
    %v158 = vld [vmem:[#allocation5 + $0x258] sm:$0xff]
    %v159 = vld [vmem:[#allocation5 + $0x260] sm:$0xff]
    %v160 = vld [vmem:[#allocation5 + $0x268] sm:$0xff]
    %v161 = vld [vmem:[#allocation5 + $0x270] sm:$0xff]
    %v162 = vld [vmem:[#allocation5 + $0x278] sm:$0xff]
    %v163 = vld [vmem:[#allocation5 + $0x280] sm:$0xff]
    %v164 = vld [vmem:[#allocation5 + $0x288] sm:$0xff]
    %v165 = vld [vmem:[#allocation5 + $0x290] sm:$0xff]
    %v166 = vld [vmem:[#allocation5 + $0x298] sm:$0xff]
    %v167 = vld [vmem:[#allocation5 + $0x2a0] sm:$0xff]
    %v168 = vld [vmem:[#allocation5 + $0x2a8] sm:$0xff]
    %v169 = vld [vmem:[#allocation5 + $0x2b0] sm:$0xff]
    %v170 = vld [vmem:[#allocation5 + $0x2b8] sm:$0xff]
    %v171 = vld [vmem:[#allocation5 + $0x2c0] sm:$0xff]
    %v172 = vld [vmem:[#allocation5 + $0x2c8] sm:$0xff]
    %v173 = vld [vmem:[#allocation5 + $0x2d0] sm:$0xff]
    %v174 = vld [vmem:[#allocation5 + $0x2d8] sm:$0xff]
    %v175 = vld [vmem:[#allocation5 + $0x2e0] sm:$0xff]
    %v176 = vld [vmem:[#allocation5 + $0x2e8] sm:$0xff]
    %v177 = vld [vmem:[#allocation5 + $0x2f0] sm:$0xff]
    %v178 = vld [vmem:[#allocation5 + $0x2f8] sm:$0xff]
    %v179 = vld [vmem:[#allocation5 + $0x300] sm:$0xff]
    %v180 = vld [vmem:[#allocation5 + $0x308] sm:$0xff]
    %v181 = vld [vmem:[#allocation5 + $0x310] sm:$0xff]
    %v182 = vld [vmem:[#allocation5 + $0x318] sm:$0xff]
    %v183 = vld [vmem:[#allocation5 + $0x320] sm:$0xff]
    %v184 = vld [vmem:[#allocation5 + $0x328] sm:$0xff]
    %v185 = vld [vmem:[#allocation5 + $0x330] sm:$0xff]
    %v186 = vld [vmem:[#allocation5 + $0x338] sm:$0xff]
    %v187 = vld [vmem:[#allocation5 + $0x340] sm:$0xff]
    %v188 = vld [vmem:[#allocation5 + $0x348] sm:$0xff]
    %v189 = vld [vmem:[#allocation5 + $0x350] sm:$0xff]
    %v190 = vld [vmem:[#allocation5 + $0x358] sm:$0xff]
    %v191 = vld [vmem:[#allocation5 + $0x360] sm:$0xff]
    %v192 = vld [vmem:[#allocation5 + $0x368] sm:$0xff]
    %v193 = vld [vmem:[#allocation5 + $0x370] sm:$0xff]
    %v194 = vld [vmem:[#allocation5 + $0x378] sm:$0xff]
    %v195 = vld [vmem:[#allocation5 + $0x380] sm:$0xff]
    %v196 = vld [vmem:[#allocation5 + $0x388] sm:$0xff]
    %v197 = vld [vmem:[#allocation5 + $0x390] sm:$0xff]
    %v198 = vld [vmem:[#allocation5 + $0x398] sm:$0xff]
    %v199 = vld [vmem:[#allocation5 + $0x3a0] sm:$0xff]
    %v200 = vld [vmem:[#allocation5 + $0x3a8] sm:$0xff]
    %v201 = vld [vmem:[#allocation5 + $0x3b0] sm:$0xff]
    %v202 = vld [vmem:[#allocation5 + $0x3b8] sm:$0xff]
    %v203 = vld [vmem:[#allocation5 + $0x3c0] sm:$0xff]
    %v204 = vld [vmem:[#allocation5 + $0x3c8] sm:$0xff]
    %v205 = vld [vmem:[#allocation5 + $0x3d0] sm:$0xff]
    %v206 = vld [vmem:[#allocation5 + $0x3d8] sm:$0xff]
    %v207 = vld [vmem:[#allocation5 + $0x3e0] sm:$0xff]
    %v208 = vld [vmem:[#allocation5 + $0x3e8] sm:$0xff]
    %v209 = vld [vmem:[#allocation5 + $0x3f0] sm:$0xff]
    %v210 = vld [vmem:[#allocation5 + $0x3f8] sm:$0xff]
    %v211 = vld [vmem:[#allocation5 + $0x400] sm:$0xff]
    %v212 = vld [vmem:[#allocation5 + $0x408] sm:$0xff]
    %v213 = vld [vmem:[#allocation5 + $0x410] sm:$0xff]
    %v214 = vld [vmem:[#allocation5 + $0x418] sm:$0xff]
    %v215 = vld [vmem:[#allocation5 + $0x420] sm:$0xff]
    %v216 = vld [vmem:[#allocation5 + $0x428] sm:$0xff]
    %v217 = vld [vmem:[#allocation5 + $0x430] sm:$0xff]
    %v218 = vld [vmem:[#allocation5 + $0x438] sm:$0xff]
    %v219 = vld [vmem:[#allocation5 + $0x440] sm:$0xff]
    %v220 = vld [vmem:[#allocation5 + $0x448] sm:$0xff]
    %v221 = vld [vmem:[#allocation5 + $0x450] sm:$0xff]
    %v222 = vld [vmem:[#allocation5 + $0x458] sm:$0xff]
    %v223 = vld [vmem:[#allocation5 + $0x460] sm:$0xff]
    %v224 = vld [vmem:[#allocation5 + $0x468] sm:$0xff]
    %v225 = vld [vmem:[#allocation5 + $0x470] sm:$0xff]
    %v226 = vld [vmem:[#allocation5 + $0x478] sm:$0xff]
    %v227 = vld [vmem:[#allocation5 + $0x480] sm:$0xff]
    %v228 = vld [vmem:[#allocation5 + $0x488] sm:$0xff]
    %v229 = vld [vmem:[#allocation5 + $0x490] sm:$0xff]
    %v230 = vld [vmem:[#allocation5 + $0x498] sm:$0xff]
    %v231 = vld [vmem:[#allocation5 + $0x4a0] sm:$0xff]
    %v232 = vld [vmem:[#allocation5 + $0x4a8] sm:$0xff]
    %v233 = vld [vmem:[#allocation5 + $0x4b0] sm:$0xff]
    %v234 = vld [vmem:[#allocation5 + $0x4b8] sm:$0xff]
    %v235 = vld [vmem:[#allocation5 + $0x4c0] sm:$0xff]
    %v236 = vld [vmem:[#allocation5 + $0x4c8] sm:$0xff]
    %v237 = vld [vmem:[#allocation5 + $0x4d0] sm:$0xff]
    %v238 = vld [vmem:[#allocation5 + $0x4d8] sm:$0xff]
    %v239 = vld [vmem:[#allocation5 + $0x4e0] sm:$0xff]
    %v240 = vld [vmem:[#allocation5 + $0x4e8] sm:$0xff]
    %v241 = vld [vmem:[#allocation5 + $0x4f0] sm:$0xff]
    %v242 = vld [vmem:[#allocation5 + $0x4f8] sm:$0xff]
    %v243 = vld [vmem:[#allocation5 + $0x500] sm:$0xff]
    %v244 = vld [vmem:[#allocation5 + $0x508] sm:$0xff]
    %v245 = vld [vmem:[#allocation5 + $0x510] sm:$0xff]
    %v246 = vld [vmem:[#allocation5 + $0x518] sm:$0xff]
    %v247 = vld [vmem:[#allocation5 + $0x520] sm:$0xff]
    %v248 = vld [vmem:[#allocation5 + $0x528] sm:$0xff]
    %v249 = vld [vmem:[#allocation5 + $0x530] sm:$0xff]
    %v250 = vld [vmem:[#allocation5 + $0x538] sm:$0xff]
    %v251 = vld [vmem:[#allocation5 + $0x540] sm:$0xff]
    %v252 = vld [vmem:[#allocation5 + $0x548] sm:$0xff]
    %v253 = vld [vmem:[#allocation5 + $0x550] sm:$0xff]
    %v254 = vld [vmem:[#allocation5 + $0x558] sm:$0xff]
    %v255 = vld [vmem:[#allocation5 + $0x560] sm:$0xff]
    %v256 = vld [vmem:[#allocation5 + $0x568] sm:$0xff]
    %v257 = vld [vmem:[#allocation5 + $0x570] sm:$0xff]
    %v258 = vld [vmem:[#allocation5 + $0x578] sm:$0xff]
    %v259 = vld [vmem:[#allocation5 + $0x580] sm:$0xff]
    %v260 = vld [vmem:[#allocation5 + $0x588] sm:$0xff]
    %v261 = vld [vmem:[#allocation5 + $0x590] sm:$0xff]
    %v262 = vld [vmem:[#allocation5 + $0x598] sm:$0xff]
    %v263 = vld [vmem:[#allocation5 + $0x5a0] sm:$0xff]
    %v264 = vld [vmem:[#allocation5 + $0x5a8] sm:$0xff]
    %v265 = vld [vmem:[#allocation5 + $0x5b0] sm:$0xff]
    %v266 = vld [vmem:[#allocation5 + $0x5b8] sm:$0xff]
    %v267 = vld [vmem:[#allocation5 + $0x5c0] sm:$0xff]
    %v268 = vld [vmem:[#allocation5 + $0x5c8] sm:$0xff]
    %v269 = vld [vmem:[#allocation5 + $0x5d0] sm:$0xff]
    %v270 = vld [vmem:[#allocation5 + $0x5d8] sm:$0xff]
    %v271 = vld [vmem:[#allocation5 + $0x5e0] sm:$0xff]
    %v272 = vld [vmem:[#allocation5 + $0x5e8] sm:$0xff]
    %v273 = vld [vmem:[#allocation5 + $0x5f0] sm:$0xff]
    %v274 = vld [vmem:[#allocation5 + $0x5f8] sm:$0xff]
    %v275 = vld [vmem:[#allocation5 + $0x600] sm:$0xff]
    %v276 = vld [vmem:[#allocation5 + $0x608] sm:$0xff]
    %v277 = vld [vmem:[#allocation5 + $0x610] sm:$0xff]
    %v278 = vld [vmem:[#allocation5 + $0x618] sm:$0xff]
    %v279 = vld [vmem:[%s2] sm:$0xf]
    %v280 = vld [vmem:[#allocation7] sm:$0xff]
    %v281 = vld [vmem:[#allocation7 + $0x8] sm:$0xff]
    %v282 = vld [vmem:[#allocation7 + $0x10] sm:$0xff]
    %v283 = vld [vmem:[#allocation7 + $0x18] sm:$0xff]
    %v284 = vld [vmem:[#allocation7 + $0x20] sm:$0xff]
    %v285 = vld [vmem:[#allocation7 + $0x28] sm:$0xff]
    %v286 = vld [vmem:[#allocation7 + $0x30] sm:$0xff]
    %v287 = vld [vmem:[#allocation7 + $0x38] sm:$0xff]
    %v288 = vld [vmem:[#allocation7 + $0x40] sm:$0xff]
    %v289 = vld [vmem:[#allocation7 + $0x48] sm:$0xff]
    %v290 = vld [vmem:[#allocation7 + $0x50] sm:$0xff]
    %v291 = vld [vmem:[#allocation7 + $0x58] sm:$0xff]
    %v292 = vld [vmem:[#allocation7 + $0x60] sm:$0xff]
    %v293 = vld [vmem:[#allocation7 + $0x68] sm:$0xff]
    %v294 = vld [vmem:[#allocation7 + $0x70] sm:$0xff]
    %v295 = vld [vmem:[#allocation7 + $0x78] sm:$0xff]
    %v296 = vld [vmem:[#allocation7 + $0x80] sm:$0xff]
    %v297 = vld [vmem:[#allocation7 + $0x88] sm:$0xff]
    %v298 = vld [vmem:[#allocation7 + $0x90] sm:$0xff]
    %v299 = vld [vmem:[#allocation7 + $0x98] sm:$0xff]
    %v300 = vld [vmem:[#allocation7 + $0xa0] sm:$0xff]
    %v301 = vld [vmem:[#allocation7 + $0xa8] sm:$0xff]
    %v302 = vld [vmem:[#allocation7 + $0xb0] sm:$0xff]
    %v303 = vld [vmem:[#allocation7 + $0xb8] sm:$0xff]
    %v304 = vld [vmem:[#allocation7 + $0xc0] sm:$0xff]
    %v305 = vld [vmem:[#allocation7 + $0xc8] sm:$0xff]
    %v306 = vld [vmem:[#allocation7 + $0xd0] sm:$0xff]
    %v307 = vld [vmem:[#allocation7 + $0xd8] sm:$0xff]
    %v308 = vld [vmem:[#allocation7 + $0xe0] sm:$0xff]
    %v309 = vld [vmem:[#allocation7 + $0xe8] sm:$0xff]
    %v310 = vld [vmem:[#allocation7 + $0xf0] sm:$0xff]
    %v311 = vld [vmem:[#allocation7 + $0xf8] sm:$0xff]
    %v312 = vld [vmem:[#allocation7 + $0x100] sm:$0xff]
    %v313 = vld [vmem:[#allocation7 + $0x108] sm:$0xff]
    %v314 = vld [vmem:[#allocation7 + $0x110] sm:$0xff]
    %v315 = vld [vmem:[#allocation7 + $0x118] sm:$0xff]
    %v316 = vld [vmem:[#allocation7 + $0x120] sm:$0xff]
    %v317 = vld [vmem:[#allocation7 + $0x128] sm:$0xff]
    %v318 = vld [vmem:[#allocation7 + $0x130] sm:$0xff]
    %v319 = vld [vmem:[#allocation7 + $0x138] sm:$0xff]
    %v320 = vld [vmem:[#allocation7 + $0x140] sm:$0xff]
    %v321 = vld [vmem:[#allocation7 + $0x148] sm:$0xff]
    %v322 = vld [vmem:[#allocation7 + $0x150] sm:$0xff]
    %v323 = vld [vmem:[#allocation7 + $0x158] sm:$0xff]
    %v324 = vld [vmem:[#allocation7 + $0x160] sm:$0xff]
    %v325 = vld [vmem:[#allocation7 + $0x168] sm:$0xff]
    %v326 = vld [vmem:[#allocation7 + $0x170] sm:$0xff]
    %v327 = vld [vmem:[#allocation7 + $0x178] sm:$0xff]
    %v328 = vld [vmem:[#allocation7 + $0x180] sm:$0xff]
    %v329 = vld [vmem:[#allocation7 + $0x188] sm:$0xff]
    %v330 = vld [vmem:[#allocation7 + $0x190] sm:$0xff]
    %v331 = vld [vmem:[#allocation7 + $0x198] sm:$0xff]
    %v332 = vld [vmem:[#allocation7 + $0x1a0] sm:$0xff]
    %v333 = vld [vmem:[#allocation7 + $0x1a8] sm:$0xff]
    %v334 = vld [vmem:[#allocation7 + $0x1b0] sm:$0xff]
    %v335 = vld [vmem:[#allocation7 + $0x1b8] sm:$0xff]
    %v336 = vld [vmem:[#allocation7 + $0x1c0] sm:$0xff]
    %v337 = vld [vmem:[#allocation7 + $0x1c8] sm:$0xff]
    %v338 = vld [vmem:[#allocation7 + $0x1d0] sm:$0xff]
    %v339 = vld [vmem:[#allocation7 + $0x1d8] sm:$0xff]
    %v340 = vld [vmem:[#allocation7 + $0x1e0] sm:$0xff]
    %v341 = vld [vmem:[#allocation7 + $0x1e8] sm:$0xff]
    %v342 = vld [vmem:[#allocation7 + $0x1f0] sm:$0xff]
    %v343 = vld [vmem:[#allocation7 + $0x1f8] sm:$0xff]
    %v344 = vld [vmem:[%s4] sm:$0x3]
    %v345 = vld [vmem:[#allocation8] sm:$0xf]
    %v346 = vld [vmem:[#allocation8 + $0x4] sm:$0xf]
    %v347 = vld [vmem:[#allocation8 + $0x8] sm:$0xf]
    %v348 = vld [vmem:[#allocation8 + $0xc] sm:$0xf]
    %v349 = vld [vmem:[#allocation8 + $0x10] sm:$0xf]
    %v350 = vld [vmem:[#allocation8 + $0x14] sm:$0xf]
    %v351 = vld [vmem:[#allocation8 + $0x18] sm:$0xf]
    %v352 = vld [vmem:[#allocation8 + $0x1c] sm:$0xf]
    %v353 = vld [vmem:[#allocation8 + $0x20] sm:$0xf]
    %v354 = vld [vmem:[#allocation8 + $0x24] sm:$0xf]
    %v355 = vld [vmem:[#allocation8 + $0x28] sm:$0xf]
    %v356 = vld [vmem:[#allocation8 + $0x2c] sm:$0xf]
    %v357 = vld [vmem:[#allocation8 + $0x30] sm:$0xf]
    %v358 = vld [vmem:[#allocation8 + $0x34] sm:$0xf]
    %v359 = vld [vmem:[#allocation8 + $0x38] sm:$0xf]
    %v360 = vld [vmem:[#allocation8 + $0x3c] sm:$0xf]
    %v361 = vld [vmem:[#allocation8 + $0x40] sm:$0xf]
    %v362 = vld [vmem:[#allocation8 + $0x44] sm:$0xf]
    %v363 = vld [vmem:[#allocation8 + $0x48] sm:$0xf]
    %v364 = vld [vmem:[#allocation8 + $0x4c] sm:$0xf]
    %v365 = vld [vmem:[#allocation8 + $0x50] sm:$0xf]
    %v366 = vld [vmem:[#allocation8 + $0x54] sm:$0xf]
    %v367 = vld [vmem:[#allocation8 + $0x58] sm:$0xf]
    %v368 = vld [vmem:[#allocation8 + $0x5c] sm:$0xf]
    %v369 = vld [vmem:[#allocation8 + $0x60] sm:$0xf]
    %v370 = vld [vmem:[#allocation8 + $0x64] sm:$0xf]
    %v371 = vld [vmem:[#allocation8 + $0x68] sm:$0xf]
    %v372 = vld [vmem:[#allocation8 + $0x6c] sm:$0xf]
    %v373 = vld [vmem:[#allocation8 + $0x70] sm:$0xf]
    %v374 = vld [vmem:[#allocation8 + $0x74] sm:$0xf]
    %v375 = vld [vmem:[#allocation8 + $0x78] sm:$0xf]
    %v376 = vld [vmem:[#allocation8 + $0x7c] sm:$0xf]
    %v377 = vld [vmem:[%s6] sm:$0x1]
    %v378 = vld [vmem:[#allocation2] sm:$0xff]
    %v379 = vld [vmem:[#allocation2 + $0x8] sm:$0xff]
    %v380 = vld [vmem:[#allocation2 + $0x10] sm:$0xff]
    %v381 = vld [vmem:[#allocation2 + $0x18] sm:$0xf]
    %v382 = vld [vmem:[#allocation2 + $0x1c] sm:$0xff]
    %v383 = vld [vmem:[#allocation2 + $0x24] sm:$0xff]
    %v384 = vld [vmem:[#allocation2 + $0x2c] sm:$0xff]
    %v385 = vld [vmem:[#allocation2 + $0x34] sm:$0xf]
    %v387 = vlaneseq
    %v388 = vshrl.u32 %v387, 7
    %v389 = vsub.s32 0, %v388
    %v390 = vrot.slane %v279, %v389
    %v391 = vlaneseq
    %v392 = vshrl.u32 %v391, 7
    %v393 = vsub.s32 1, %v392
    %v394 = vrot.slane %v279, %v393
    %v395 = vlaneseq
    %v396 = vshrl.u32 %v395, 7
    %v397 = vsub.s32 2, %v396
    %v398 = vrot.slane %v279, %v397
    %v399 = vlaneseq
    %v400 = vshrl.u32 %v399, 7
    %v401 = vsub.s32 3, %v400
    %v402 = vrot.slane %v279, %v401
    %v415 = vunpack.c.l.b16 %v378
    %v416 = vunpack.c.h.b16 %v378
    %v417 = vunpack.c.l.b16 %v379
    %v418 = vunpack.c.h.b16 %v379
    %v419 = vunpack.c.l.b16 %v380
    %v420 = vunpack.c.h.b16 %v380
    %v421 = vunpack.c.l.b16 %v381
    %v422 = vunpack.c.l.b16 %v382
    %v423 = vunpack.c.h.b16 %v382
    %v424 = vunpack.c.l.b16 %v383
    %v425 = vunpack.c.h.b16 %v383
    %v426 = vunpack.c.l.b16 %v384
    %v427 = vunpack.c.h.b16 %v384
    %v428 = vunpack.c.l.b16 %v385
    %v429 = vpack.c.b16 %v422, %v415
    %v430 = vpack.c.b16 %v423, %v416
    %v431 = vpack.c.b16 %v424, %v417
    %v432 = vpack.c.b16 %v425, %v418
    %v433 = vpack.c.b16 %v426, %v419
    %v434 = vpack.c.b16 %v427, %v420
    %v435 = vpack.c.b16 %v428, %v421
    %v638 = vunpack.c.l.b16 %v83
    %v639 = vunpack.c.h.b16 %v83
    %v640 = vunpack.c.l.b16 %v84
    %v641 = vunpack.c.h.b16 %v84
    %v642 = vunpack.c.l.b16 %v85
    %v643 = vunpack.c.h.b16 %v85
    %v644 = vunpack.c.l.b16 %v86
    %v645 = vunpack.c.h.b16 %v86
    %v646 = vunpack.c.l.b16 %v87
    %v647 = vunpack.c.h.b16 %v87
    %v648 = vunpack.c.l.b16 %v88
    %v649 = vunpack.c.h.b16 %v88
    %v650 = vunpack.c.l.b16 %v89
    %v651 = vunpack.c.h.b16 %v89
    %v652 = vunpack.c.l.b16 %v90
    %v653 = vunpack.c.h.b16 %v90
    %v654 = vunpack.c.l.b16 %v91
    %v655 = vunpack.c.h.b16 %v91
    %v656 = vunpack.c.l.b16 %v92
    %v657 = vunpack.c.h.b16 %v92
    %v658 = vunpack.c.l.b16 %v93
    %v659 = vunpack.c.h.b16 %v93
    %v660 = vunpack.c.l.b16 %v94
    %v661 = vunpack.c.h.b16 %v94
    %v662 = vunpack.c.l.b16 %v95
    %v663 = vunpack.c.h.b16 %v95
    %v664 = vunpack.c.l.b16 %v96
    %v665 = vunpack.c.h.b16 %v96
    %v666 = vunpack.c.l.b16 %v97
    %v667 = vunpack.c.h.b16 %v97
    %v668 = vunpack.c.l.b16 %v98
    %v669 = vunpack.c.h.b16 %v98
    %v670 = vunpack.c.l.b16 %v99
    %v671 = vunpack.c.h.b16 %v99
    %v672 = vunpack.c.l.b16 %v100
    %v673 = vunpack.c.h.b16 %v100
    %v674 = vunpack.c.l.b16 %v101
    %v675 = vunpack.c.h.b16 %v101
    %v676 = vunpack.c.l.b16 %v102
    %v677 = vunpack.c.h.b16 %v102
    %v678 = vunpack.c.l.b16 %v103
    %v679 = vunpack.c.h.b16 %v103
    %v680 = vunpack.c.l.b16 %v104
    %v681 = vunpack.c.h.b16 %v104
    %v682 = vunpack.c.l.b16 %v105
    %v683 = vunpack.c.h.b16 %v105
    %v684 = vunpack.c.l.b16 %v106
    %v685 = vunpack.c.h.b16 %v106
    %v686 = vunpack.c.l.b16 %v107
    %v687 = vunpack.c.h.b16 %v107
    %v688 = vunpack.c.l.b16 %v108
    %v689 = vunpack.c.h.b16 %v108
    %v690 = vunpack.c.l.b16 %v109
    %v691 = vunpack.c.h.b16 %v109
    %v692 = vunpack.c.l.b16 %v110
    %v693 = vunpack.c.h.b16 %v110
    %v694 = vunpack.c.l.b16 %v111
    %v695 = vunpack.c.h.b16 %v111
    %v696 = vunpack.c.l.b16 %v112
    %v697 = vunpack.c.h.b16 %v112
    %v698 = vunpack.c.l.b16 %v113
    %v699 = vunpack.c.h.b16 %v113
    %v700 = vunpack.c.l.b16 %v114
    %v701 = vunpack.c.h.b16 %v114
    %v702 = vunpack.c.l.b16 %v115
    %v703 = vunpack.c.h.b16 %v115
    %v704 = vunpack.c.l.b16 %v116
    %v705 = vunpack.c.h.b16 %v116
    %v706 = vunpack.c.l.b16 %v117
    %v707 = vunpack.c.h.b16 %v117
    %v708 = vunpack.c.l.b16 %v118
    %v709 = vunpack.c.h.b16 %v118
    %v710 = vunpack.c.l.b16 %v119
    %v711 = vunpack.c.h.b16 %v119
    %v712 = vunpack.c.l.b16 %v120
    %v713 = vunpack.c.h.b16 %v120
    %v714 = vunpack.c.l.b16 %v121
    %v715 = vunpack.c.h.b16 %v121
    %v716 = vunpack.c.l.b16 %v122
    %v717 = vunpack.c.h.b16 %v122
    %v718 = vunpack.c.l.b16 %v123
    %v719 = vunpack.c.h.b16 %v123
    %v720 = vunpack.c.l.b16 %v124
    %v721 = vunpack.c.h.b16 %v124
    %v722 = vunpack.c.l.b16 %v125
    %v723 = vunpack.c.h.b16 %v125
    %v724 = vunpack.c.l.b16 %v126
    %v725 = vunpack.c.h.b16 %v126
    %v726 = vunpack.c.l.b16 %v127
    %v727 = vunpack.c.h.b16 %v127
    %v728 = vunpack.c.l.b16 %v128
    %v729 = vunpack.c.h.b16 %v128
    %v730 = vunpack.c.l.b16 %v129
    %v731 = vunpack.c.h.b16 %v129
    %v732 = vunpack.c.l.b16 %v130
    %v733 = vunpack.c.h.b16 %v130
    %v734 = vunpack.c.l.b16 %v131
    %v735 = vunpack.c.h.b16 %v131
    %v736 = vunpack.c.l.b16 %v132
    %v737 = vunpack.c.h.b16 %v132
    %v738 = vunpack.c.l.b16 %v133
    %v739 = vunpack.c.h.b16 %v133
    %v740 = vunpack.c.l.b16 %v134
    %v741 = vunpack.c.h.b16 %v134
    %v742 = vunpack.c.l.b16 %v135
    %v743 = vunpack.c.h.b16 %v135
    %v744 = vunpack.c.l.b16 %v136
    %v745 = vunpack.c.h.b16 %v136
    %v746 = vunpack.c.l.b16 %v137
    %v747 = vunpack.c.h.b16 %v137
    %v748 = vunpack.c.l.b16 %v138
    %v749 = vunpack.c.h.b16 %v138
    %v750 = vunpack.c.l.b16 %v139
    %v751 = vunpack.c.h.b16 %v139
    %v752 = vunpack.c.l.b16 %v140
    %v753 = vunpack.c.h.b16 %v140
    %v754 = vunpack.c.l.b16 %v141
    %v755 = vunpack.c.h.b16 %v141
    %v756 = vunpack.c.l.b16 %v142
    %v757 = vunpack.c.h.b16 %v142
    %v758 = vunpack.c.l.b16 %v143
    %v759 = vunpack.c.h.b16 %v143
    %v760 = vunpack.c.l.b16 %v144
    %v761 = vunpack.c.h.b16 %v144
    %v762 = vunpack.c.l.b16 %v145
    %v763 = vunpack.c.h.b16 %v145
    %v764 = vunpack.c.l.b16 %v146
    %v765 = vunpack.c.h.b16 %v146
    %v766 = vunpack.c.l.b16 %v147
    %v767 = vunpack.c.h.b16 %v147
    %v768 = vunpack.c.l.b16 %v148
    %v769 = vunpack.c.h.b16 %v148
    %v770 = vunpack.c.l.b16 %v149
    %v771 = vunpack.c.h.b16 %v149
    %v772 = vunpack.c.l.b16 %v150
    %v773 = vunpack.c.h.b16 %v150
    %v774 = vunpack.c.l.b16 %v151
    %v775 = vunpack.c.h.b16 %v151
    %v776 = vunpack.c.l.b16 %v152
    %v777 = vunpack.c.h.b16 %v152
    %v778 = vunpack.c.l.b16 %v153
    %v779 = vunpack.c.h.b16 %v153
    %v780 = vunpack.c.l.b16 %v154
    %v781 = vunpack.c.h.b16 %v154
    %v782 = vunpack.c.l.b16 %v155
    %v783 = vunpack.c.h.b16 %v155
    %v784 = vunpack.c.l.b16 %v156
    %v785 = vunpack.c.h.b16 %v156
    %v786 = vunpack.c.l.b16 %v157
    %v787 = vunpack.c.h.b16 %v157
    %v788 = vunpack.c.l.b16 %v158
    %v789 = vunpack.c.h.b16 %v158
    %v790 = vunpack.c.l.b16 %v159
    %v791 = vunpack.c.h.b16 %v159
    %v792 = vunpack.c.l.b16 %v160
    %v793 = vunpack.c.h.b16 %v160
    %v794 = vunpack.c.l.b16 %v161
    %v795 = vunpack.c.h.b16 %v161
    %v796 = vunpack.c.l.b16 %v162
    %v797 = vunpack.c.h.b16 %v162
    %v798 = vunpack.c.l.b16 %v163
    %v799 = vunpack.c.h.b16 %v163
    %v800 = vunpack.c.l.b16 %v164
    %v801 = vunpack.c.h.b16 %v164
    %v802 = vunpack.c.l.b16 %v165
    %v803 = vunpack.c.h.b16 %v165
    %v804 = vunpack.c.l.b16 %v166
    %v805 = vunpack.c.h.b16 %v166
    %v806 = vunpack.c.l.b16 %v167
    %v807 = vunpack.c.h.b16 %v167
    %v808 = vunpack.c.l.b16 %v168
    %v809 = vunpack.c.h.b16 %v168
    %v810 = vunpack.c.l.b16 %v169
    %v811 = vunpack.c.h.b16 %v169
    %v812 = vunpack.c.l.b16 %v170
    %v813 = vunpack.c.h.b16 %v170
    %v814 = vunpack.c.l.b16 %v171
    %v815 = vunpack.c.h.b16 %v171
    %v816 = vunpack.c.l.b16 %v172
    %v817 = vunpack.c.h.b16 %v172
    %v818 = vunpack.c.l.b16 %v173
    %v819 = vunpack.c.h.b16 %v173
    %v820 = vunpack.c.l.b16 %v174
    %v821 = vunpack.c.h.b16 %v174
    %v822 = vunpack.c.l.b16 %v175
    %v823 = vunpack.c.h.b16 %v175
    %v824 = vunpack.c.l.b16 %v176
    %v825 = vunpack.c.h.b16 %v176
    %v826 = vunpack.c.l.b16 %v177
    %v827 = vunpack.c.h.b16 %v177
    %v828 = vunpack.c.l.b16 %v178
    %v829 = vunpack.c.h.b16 %v178
    %v830 = vunpack.c.l.b16 %v179
    %v831 = vunpack.c.h.b16 %v179
    %v832 = vunpack.c.l.b16 %v180
    %v833 = vunpack.c.h.b16 %v180
    %v834 = vunpack.c.l.b16 %v181
    %v835 = vunpack.c.h.b16 %v181
    %v836 = vunpack.c.l.b16 %v182
    %v837 = vunpack.c.h.b16 %v182
    %v838 = vunpack.c.l.b16 %v183
    %v839 = vunpack.c.h.b16 %v183
    %v840 = vunpack.c.l.b16 %v184
    %v841 = vunpack.c.h.b16 %v184
    %v842 = vunpack.c.l.b16 %v185
    %v843 = vunpack.c.h.b16 %v185
    %v844 = vunpack.c.l.b16 %v186
    %v845 = vunpack.c.h.b16 %v186
    %v846 = vunpack.c.l.b16 %v187
    %v847 = vunpack.c.h.b16 %v187
    %v848 = vunpack.c.l.b16 %v188
    %v849 = vunpack.c.h.b16 %v188
    %v850 = vunpack.c.l.b16 %v189
    %v851 = vunpack.c.h.b16 %v189
    %v852 = vunpack.c.l.b16 %v190
    %v853 = vunpack.c.h.b16 %v190
    %v854 = vunpack.c.l.b16 %v191
    %v855 = vunpack.c.h.b16 %v191
    %v856 = vunpack.c.l.b16 %v192
    %v857 = vunpack.c.h.b16 %v192
    %v858 = vunpack.c.l.b16 %v193
    %v859 = vunpack.c.h.b16 %v193
    %v860 = vunpack.c.l.b16 %v194
    %v861 = vunpack.c.h.b16 %v194
    %v862 = vunpack.c.l.b16 %v195
    %v863 = vunpack.c.h.b16 %v195
    %v864 = vunpack.c.l.b16 %v196
    %v865 = vunpack.c.h.b16 %v196
    %v866 = vunpack.c.l.b16 %v197
    %v867 = vunpack.c.h.b16 %v197
    %v868 = vunpack.c.l.b16 %v198
    %v869 = vunpack.c.h.b16 %v198
    %v870 = vunpack.c.l.b16 %v199
    %v871 = vunpack.c.h.b16 %v199
    %v872 = vunpack.c.l.b16 %v200
    %v873 = vunpack.c.h.b16 %v200
    %v874 = vunpack.c.l.b16 %v201
    %v875 = vunpack.c.h.b16 %v201
    %v876 = vunpack.c.l.b16 %v202
    %v877 = vunpack.c.h.b16 %v202
    %v878 = vunpack.c.l.b16 %v203
    %v879 = vunpack.c.h.b16 %v203
    %v880 = vunpack.c.l.b16 %v204
    %v881 = vunpack.c.h.b16 %v204
    %v882 = vunpack.c.l.b16 %v205
    %v883 = vunpack.c.h.b16 %v205
    %v884 = vunpack.c.l.b16 %v206
    %v885 = vunpack.c.h.b16 %v206
    %v886 = vunpack.c.l.b16 %v207
    %v887 = vunpack.c.h.b16 %v207
    %v888 = vunpack.c.l.b16 %v208
    %v889 = vunpack.c.h.b16 %v208
    %v890 = vunpack.c.l.b16 %v209
    %v891 = vunpack.c.h.b16 %v209
    %v892 = vunpack.c.l.b16 %v210
    %v893 = vunpack.c.h.b16 %v210
    %v894 = vunpack.c.l.b16 %v211
    %v895 = vunpack.c.h.b16 %v211
    %v896 = vunpack.c.l.b16 %v212
    %v897 = vunpack.c.h.b16 %v212
    %v898 = vunpack.c.l.b16 %v213
    %v899 = vunpack.c.h.b16 %v213
    %v900 = vunpack.c.l.b16 %v214
    %v901 = vunpack.c.h.b16 %v214
    %v902 = vunpack.c.l.b16 %v215
    %v903 = vunpack.c.h.b16 %v215
    %v904 = vunpack.c.l.b16 %v216
    %v905 = vunpack.c.h.b16 %v216
    %v906 = vunpack.c.l.b16 %v217
    %v907 = vunpack.c.h.b16 %v217
    %v908 = vunpack.c.l.b16 %v218
    %v909 = vunpack.c.h.b16 %v218
    %v910 = vunpack.c.l.b16 %v219
    %v911 = vunpack.c.h.b16 %v219
    %v912 = vunpack.c.l.b16 %v220
    %v913 = vunpack.c.h.b16 %v220
    %v914 = vunpack.c.l.b16 %v221
    %v915 = vunpack.c.h.b16 %v221
    %v916 = vunpack.c.l.b16 %v222
    %v917 = vunpack.c.h.b16 %v222
    %v918 = vunpack.c.l.b16 %v223
    %v919 = vunpack.c.h.b16 %v223
    %v920 = vunpack.c.l.b16 %v224
    %v921 = vunpack.c.h.b16 %v224
    %v922 = vunpack.c.l.b16 %v225
    %v923 = vunpack.c.h.b16 %v225
    %v924 = vunpack.c.l.b16 %v226
    %v925 = vunpack.c.h.b16 %v226
    %v926 = vunpack.c.l.b16 %v227
    %v927 = vunpack.c.h.b16 %v227
    %v928 = vunpack.c.l.b16 %v228
    %v929 = vunpack.c.h.b16 %v228
    %v930 = vunpack.c.l.b16 %v229
    %v931 = vunpack.c.h.b16 %v229
    %v932 = vunpack.c.l.b16 %v230
    %v933 = vunpack.c.h.b16 %v230
    %v934 = vunpack.c.l.b16 %v231
    %v935 = vunpack.c.h.b16 %v231
    %v936 = vunpack.c.l.b16 %v232
    %v937 = vunpack.c.h.b16 %v232
    %v938 = vunpack.c.l.b16 %v233
    %v939 = vunpack.c.h.b16 %v233
    %v940 = vunpack.c.l.b16 %v234
    %v941 = vunpack.c.h.b16 %v234
    %v942 = vunpack.c.l.b16 %v235
    %v943 = vunpack.c.h.b16 %v235
    %v944 = vunpack.c.l.b16 %v236
    %v945 = vunpack.c.h.b16 %v236
    %v946 = vunpack.c.l.b16 %v237
    %v947 = vunpack.c.h.b16 %v237
    %v948 = vunpack.c.l.b16 %v238
    %v949 = vunpack.c.h.b16 %v238
    %v950 = vunpack.c.l.b16 %v239
    %v951 = vunpack.c.h.b16 %v239
    %v952 = vunpack.c.l.b16 %v240
    %v953 = vunpack.c.h.b16 %v240
    %v954 = vunpack.c.l.b16 %v241
    %v955 = vunpack.c.h.b16 %v241
    %v956 = vunpack.c.l.b16 %v242
    %v957 = vunpack.c.h.b16 %v242
    %v958 = vunpack.c.l.b16 %v243
    %v959 = vunpack.c.h.b16 %v243
    %v960 = vunpack.c.l.b16 %v244
    %v961 = vunpack.c.h.b16 %v244
    %v962 = vunpack.c.l.b16 %v245
    %v963 = vunpack.c.h.b16 %v245
    %v964 = vunpack.c.l.b16 %v246
    %v965 = vunpack.c.h.b16 %v246
    %v966 = vunpack.c.l.b16 %v247
    %v967 = vunpack.c.h.b16 %v247
    %v968 = vunpack.c.l.b16 %v248
    %v969 = vunpack.c.h.b16 %v248
    %v970 = vunpack.c.l.b16 %v249
    %v971 = vunpack.c.h.b16 %v249
    %v972 = vunpack.c.l.b16 %v250
    %v973 = vunpack.c.h.b16 %v250
    %v974 = vunpack.c.l.b16 %v251
    %v975 = vunpack.c.h.b16 %v251
    %v976 = vunpack.c.l.b16 %v252
    %v977 = vunpack.c.h.b16 %v252
    %v978 = vunpack.c.l.b16 %v253
    %v979 = vunpack.c.h.b16 %v253
    %v980 = vunpack.c.l.b16 %v254
    %v981 = vunpack.c.h.b16 %v254
    %v982 = vunpack.c.l.b16 %v255
    %v983 = vunpack.c.h.b16 %v255
    %v984 = vunpack.c.l.b16 %v256
    %v985 = vunpack.c.h.b16 %v256
    %v986 = vunpack.c.l.b16 %v257
    %v987 = vunpack.c.h.b16 %v257
    %v988 = vunpack.c.l.b16 %v258
    %v989 = vunpack.c.h.b16 %v258
    %v990 = vunpack.c.l.b16 %v259
    %v991 = vunpack.c.h.b16 %v259
    %v992 = vunpack.c.l.b16 %v260
    %v993 = vunpack.c.h.b16 %v260
    %v994 = vunpack.c.l.b16 %v261
    %v995 = vunpack.c.h.b16 %v261
    %v996 = vunpack.c.l.b16 %v262
    %v997 = vunpack.c.h.b16 %v262
    %v998 = vunpack.c.l.b16 %v263
    %v999 = vunpack.c.h.b16 %v263
    %v1000 = vunpack.c.l.b16 %v264
    %v1001 = vunpack.c.h.b16 %v264
    %v1002 = vunpack.c.l.b16 %v265
    %v1003 = vunpack.c.h.b16 %v265
    %v1004 = vunpack.c.l.b16 %v266
    %v1005 = vunpack.c.h.b16 %v266
    %v1006 = vunpack.c.l.b16 %v267
    %v1007 = vunpack.c.h.b16 %v267
    %v1008 = vunpack.c.l.b16 %v268
    %v1009 = vunpack.c.h.b16 %v268
    %v1010 = vunpack.c.l.b16 %v269
    %v1011 = vunpack.c.h.b16 %v269
    %v1012 = vunpack.c.l.b16 %v270
    %v1013 = vunpack.c.h.b16 %v270
    %v1014 = vunpack.c.l.b16 %v271
    %v1015 = vunpack.c.h.b16 %v271
    %v1016 = vunpack.c.l.b16 %v272
    %v1017 = vunpack.c.h.b16 %v272
    %v1018 = vunpack.c.l.b16 %v273
    %v1019 = vunpack.c.h.b16 %v273
    %v1020 = vunpack.c.l.b16 %v274
    %v1021 = vunpack.c.h.b16 %v274
    %v1022 = vunpack.c.l.b16 %v275
    %v1023 = vunpack.c.h.b16 %v275
    %v1024 = vunpack.c.l.b16 %v276
    %v1025 = vunpack.c.h.b16 %v276
    %v1026 = vunpack.c.l.b16 %v277
    %v1027 = vunpack.c.h.b16 %v277
    %v1028 = vunpack.c.l.b16 %v278
    %v1029 = vunpack.c.h.b16 %v278
    %v1030 = vpack.c.b16 %v642, %v638
    %v1031 = vpack.c.b16 %v643, %v639
    %v1032 = vpack.c.b16 %v644, %v640
    %v1033 = vpack.c.b16 %v645, %v641
    %v1034 = vpack.c.b16 %v650, %v646
    %v1035 = vpack.c.b16 %v651, %v647
    %v1036 = vpack.c.b16 %v652, %v648
    %v1037 = vpack.c.b16 %v653, %v649
    %v1038 = vpack.c.b16 %v658, %v654
    %v1039 = vpack.c.b16 %v659, %v655
    %v1040 = vpack.c.b16 %v660, %v656
    %v1041 = vpack.c.b16 %v661, %v657
    %v1042 = vpack.c.b16 %v666, %v662
    %v1043 = vpack.c.b16 %v667, %v663
    %v1044 = vpack.c.b16 %v668, %v664
    %v1045 = vpack.c.b16 %v669, %v665
    %v1046 = vpack.c.b16 %v674, %v670
    %v1047 = vpack.c.b16 %v675, %v671
    %v1048 = vpack.c.b16 %v676, %v672
    %v1049 = vpack.c.b16 %v677, %v673
    %v1050 = vpack.c.b16 %v682, %v678
    %v1051 = vpack.c.b16 %v683, %v679
    %v1052 = vpack.c.b16 %v684, %v680
    %v1053 = vpack.c.b16 %v685, %v681
    %v1054 = vpack.c.b16 %v690, %v686
    %v1055 = vpack.c.b16 %v691, %v687
    %v1056 = vpack.c.b16 %v692, %v688
    %v1057 = vpack.c.b16 %v693, %v689
    %v1058 = vpack.c.b16 %v698, %v694
    %v1059 = vpack.c.b16 %v699, %v695
    %v1060 = vpack.c.b16 %v700, %v696
    %v1061 = vpack.c.b16 %v701, %v697
    %v1062 = vpack.c.b16 %v706, %v702
    %v1063 = vpack.c.b16 %v707, %v703
    %v1064 = vpack.c.b16 %v708, %v704
    %v1065 = vpack.c.b16 %v709, %v705
    %v1066 = vpack.c.b16 %v714, %v710
    %v1067 = vpack.c.b16 %v715, %v711
    %v1068 = vpack.c.b16 %v716, %v712
    %v1069 = vpack.c.b16 %v717, %v713
    %v1070 = vpack.c.b16 %v722, %v718
    %v1071 = vpack.c.b16 %v723, %v719
    %v1072 = vpack.c.b16 %v724, %v720
    %v1073 = vpack.c.b16 %v725, %v721
    %v1074 = vpack.c.b16 %v730, %v726
    %v1075 = vpack.c.b16 %v731, %v727
    %v1076 = vpack.c.b16 %v732, %v728
    %v1077 = vpack.c.b16 %v733, %v729
    %v1078 = vpack.c.b16 %v738, %v734
    %v1079 = vpack.c.b16 %v739, %v735
    %v1080 = vpack.c.b16 %v740, %v736
    %v1081 = vpack.c.b16 %v741, %v737
    %v1082 = vpack.c.b16 %v746, %v742
    %v1083 = vpack.c.b16 %v747, %v743
    %v1084 = vpack.c.b16 %v748, %v744
    %v1085 = vpack.c.b16 %v749, %v745
    %v1086 = vpack.c.b16 %v754, %v750
    %v1087 = vpack.c.b16 %v755, %v751
    %v1088 = vpack.c.b16 %v756, %v752
    %v1089 = vpack.c.b16 %v757, %v753
    %v1090 = vpack.c.b16 %v762, %v758
    %v1091 = vpack.c.b16 %v763, %v759
    %v1092 = vpack.c.b16 %v764, %v760
    %v1093 = vpack.c.b16 %v765, %v761
    %v1094 = vpack.c.b16 %v770, %v766
    %v1095 = vpack.c.b16 %v771, %v767
    %v1096 = vpack.c.b16 %v772, %v768
    %v1097 = vpack.c.b16 %v773, %v769
    %v1098 = vpack.c.b16 %v778, %v774
    %v1099 = vpack.c.b16 %v779, %v775
    %v1100 = vpack.c.b16 %v780, %v776
    %v1101 = vpack.c.b16 %v781, %v777
    %v1102 = vpack.c.b16 %v786, %v782
    %v1103 = vpack.c.b16 %v787, %v783
    %v1104 = vpack.c.b16 %v788, %v784
    %v1105 = vpack.c.b16 %v789, %v785
    %v1106 = vpack.c.b16 %v794, %v790
    %v1107 = vpack.c.b16 %v795, %v791
    %v1108 = vpack.c.b16 %v796, %v792
    %v1109 = vpack.c.b16 %v797, %v793
    %v1110 = vpack.c.b16 %v802, %v798
    %v1111 = vpack.c.b16 %v803, %v799
    %v1112 = vpack.c.b16 %v804, %v800
    %v1113 = vpack.c.b16 %v805, %v801
    %v1114 = vpack.c.b16 %v810, %v806
    %v1115 = vpack.c.b16 %v811, %v807
    %v1116 = vpack.c.b16 %v812, %v808
    %v1117 = vpack.c.b16 %v813, %v809
    %v1118 = vpack.c.b16 %v818, %v814
    %v1119 = vpack.c.b16 %v819, %v815
    %v1120 = vpack.c.b16 %v820, %v816
    %v1121 = vpack.c.b16 %v821, %v817
    %v1122 = vpack.c.b16 %v826, %v822
    %v1123 = vpack.c.b16 %v827, %v823
    %v1124 = vpack.c.b16 %v828, %v824
    %v1125 = vpack.c.b16 %v829, %v825
    %v1126 = vpack.c.b16 %v834, %v830
    %v1127 = vpack.c.b16 %v835, %v831
    %v1128 = vpack.c.b16 %v836, %v832
    %v1129 = vpack.c.b16 %v837, %v833
    %v1130 = vpack.c.b16 %v842, %v838
    %v1131 = vpack.c.b16 %v843, %v839
    %v1132 = vpack.c.b16 %v844, %v840
    %v1133 = vpack.c.b16 %v845, %v841
    %v1134 = vpack.c.b16 %v850, %v846
    %v1135 = vpack.c.b16 %v851, %v847
    %v1136 = vpack.c.b16 %v852, %v848
    %v1137 = vpack.c.b16 %v853, %v849
    %v1138 = vpack.c.b16 %v858, %v854
    %v1139 = vpack.c.b16 %v859, %v855
    %v1140 = vpack.c.b16 %v860, %v856
    %v1141 = vpack.c.b16 %v861, %v857
    %v1142 = vpack.c.b16 %v866, %v862
    %v1143 = vpack.c.b16 %v867, %v863
    %v1144 = vpack.c.b16 %v868, %v864
    %v1145 = vpack.c.b16 %v869, %v865
    %v1146 = vpack.c.b16 %v874, %v870
    %v1147 = vpack.c.b16 %v875, %v871
    %v1148 = vpack.c.b16 %v876, %v872
    %v1149 = vpack.c.b16 %v877, %v873
    %v1150 = vpack.c.b16 %v882, %v878
    %v1151 = vpack.c.b16 %v883, %v879
    %v1152 = vpack.c.b16 %v884, %v880
    %v1153 = vpack.c.b16 %v885, %v881
    %v1154 = vpack.c.b16 %v890, %v886
    %v1155 = vpack.c.b16 %v891, %v887
    %v1156 = vpack.c.b16 %v892, %v888
    %v1157 = vpack.c.b16 %v893, %v889
    %v1158 = vpack.c.b16 %v898, %v894
    %v1159 = vpack.c.b16 %v899, %v895
    %v1160 = vpack.c.b16 %v900, %v896
    %v1161 = vpack.c.b16 %v901, %v897
    %v1162 = vpack.c.b16 %v906, %v902
    %v1163 = vpack.c.b16 %v907, %v903
    %v1164 = vpack.c.b16 %v908, %v904
    %v1165 = vpack.c.b16 %v909, %v905
    %v1166 = vpack.c.b16 %v914, %v910
    %v1167 = vpack.c.b16 %v915, %v911
    %v1168 = vpack.c.b16 %v916, %v912
    %v1169 = vpack.c.b16 %v917, %v913
    %v1170 = vpack.c.b16 %v922, %v918
    %v1171 = vpack.c.b16 %v923, %v919
    %v1172 = vpack.c.b16 %v924, %v920
    %v1173 = vpack.c.b16 %v925, %v921
    %v1174 = vpack.c.b16 %v930, %v926
    %v1175 = vpack.c.b16 %v931, %v927
    %v1176 = vpack.c.b16 %v932, %v928
    %v1177 = vpack.c.b16 %v933, %v929
    %v1178 = vpack.c.b16 %v938, %v934
    %v1179 = vpack.c.b16 %v939, %v935
    %v1180 = vpack.c.b16 %v940, %v936
    %v1181 = vpack.c.b16 %v941, %v937
    %v1182 = vpack.c.b16 %v946, %v942
    %v1183 = vpack.c.b16 %v947, %v943
    %v1184 = vpack.c.b16 %v948, %v944
    %v1185 = vpack.c.b16 %v949, %v945
    %v1186 = vpack.c.b16 %v954, %v950
    %v1187 = vpack.c.b16 %v955, %v951
    %v1188 = vpack.c.b16 %v956, %v952
    %v1189 = vpack.c.b16 %v957, %v953
    %v1190 = vpack.c.b16 %v962, %v958
    %v1191 = vpack.c.b16 %v963, %v959
    %v1192 = vpack.c.b16 %v964, %v960
    %v1193 = vpack.c.b16 %v965, %v961
    %v1194 = vpack.c.b16 %v970, %v966
    %v1195 = vpack.c.b16 %v971, %v967
    %v1196 = vpack.c.b16 %v972, %v968
    %v1197 = vpack.c.b16 %v973, %v969
    %v1198 = vpack.c.b16 %v978, %v974
    %v1199 = vpack.c.b16 %v979, %v975
    %v1200 = vpack.c.b16 %v980, %v976
    %v1201 = vpack.c.b16 %v981, %v977
    %v1202 = vpack.c.b16 %v986, %v982
    %v1203 = vpack.c.b16 %v987, %v983
    %v1204 = vpack.c.b16 %v988, %v984
    %v1205 = vpack.c.b16 %v989, %v985
    %v1206 = vpack.c.b16 %v994, %v990
    %v1207 = vpack.c.b16 %v995, %v991
    %v1208 = vpack.c.b16 %v996, %v992
    %v1209 = vpack.c.b16 %v997, %v993
    %v1210 = vpack.c.b16 %v1002, %v998
    %v1211 = vpack.c.b16 %v1003, %v999
    %v1212 = vpack.c.b16 %v1004, %v1000
    %v1213 = vpack.c.b16 %v1005, %v1001
    %v1214 = vpack.c.b16 %v1010, %v1006
    %v1215 = vpack.c.b16 %v1011, %v1007
    %v1216 = vpack.c.b16 %v1012, %v1008
    %v1217 = vpack.c.b16 %v1013, %v1009
    %v1218 = vpack.c.b16 %v1018, %v1014
    %v1219 = vpack.c.b16 %v1019, %v1015
    %v1220 = vpack.c.b16 %v1020, %v1016
    %v1221 = vpack.c.b16 %v1021, %v1017
    %v1222 = vpack.c.b16 %v1026, %v1022
    %v1223 = vpack.c.b16 %v1027, %v1023
    %v1224 = vpack.c.b16 %v1028, %v1024
    %v1225 = vpack.c.b16 %v1029, %v1025
    %vm1422 = vcmask 130048
    %v1424 = vsel %vm1422, %v435, 0
    %1426 = vmatprep.subr.bf16.mxu0 %v1031
    %1427 = vmatpush1.bf16.msra.mxu0 %v1030
    %1428 = vmatprep.subr.bf16.mxu0 %v1035
    %1429 = vmatpush1.bf16.msra.mxu0 %v1034
    %1430 = vmatprep.subr.bf16.mxu0 %v1039
    %1431 = vmatpush1.bf16.msra.mxu0 %v1038
    %1432 = vmatprep.subr.bf16.mxu0 %v1043
    %1433 = vmatpush1.bf16.msra.mxu0 %v1042
    %1434 = vmatprep.subr.bf16.mxu0 %v1047
    %1435 = vmatpush1.bf16.msra.mxu0 %v1046
    %1436 = vmatprep.subr.bf16.mxu0 %v1051
    %1437 = vmatpush1.bf16.msra.mxu0 %v1050
    %1438 = vmatprep.subr.bf16.mxu0 %v1055
    %1439 = vmatpush1.bf16.msra.mxu0 %v1054
    %1440 = vmatprep.subr.bf16.mxu0 %v1059
    %1441 = vmatpush1.bf16.msra.mxu0 %v1058
    %1442 = vmatprep.subr.bf16.mxu0 %v1063
    %1443 = vmatpush1.bf16.msra.mxu0 %v1062
    %1444 = vmatprep.subr.bf16.mxu0 %v1067
    %1445 = vmatpush1.bf16.msra.mxu0 %v1066
    %1446 = vmatprep.subr.bf16.mxu0 %v1071
    %1447 = vmatpush1.bf16.msra.mxu0 %v1070
    %1448 = vmatprep.subr.bf16.mxu0 %v1075
    %1449 = vmatpush1.bf16.msra.mxu0 %v1074
    %1450 = vmatprep.subr.bf16.mxu0 %v1079
    %1451 = vmatpush1.bf16.msra.mxu0 %v1078
    %1452 = vmatprep.subr.bf16.mxu0 %v1083
    %1453 = vmatpush1.bf16.msra.mxu0 %v1082
    %1454 = vmatprep.subr.bf16.mxu0 %v1087
    %1455 = vmatpush1.bf16.msra.mxu0 %v1086
    %1456 = vmatprep.subr.bf16.mxu0 %v1091
    %1457 = vmatpush1.bf16.msra.mxu0 %v1090
    %1458 = vmatprep.mubr.bf16.mxu0 %v430
    %1459 = vmatmul.mubr.bf16.gmra.mrb[0].mxu0 %v429
    %v1460 = vpop.f32.mrb[0].mxu0
    %v1461 = vadd.f32 %v390, %v1460
    %v1462 = vpop.f32.mrb[0].mxu0
    %v1463 = vadd.f32 %v394, %v1462
    %v1464 = vpop.f32.mrb[0].mxu0
    %v1465 = vadd.f32 %v390, %v1464
    %v1466 = vpop.f32.mrb[0].mxu0
    %v1467 = vadd.f32 %v394, %v1466
    %1468 = vdwg.mxu0
    %1469 = vmatprep.subr.bf16.mxu0 %v1095
    %1470 = vmatpush1.bf16.msra.mxu0 %v1094
    %1471 = vmatprep.subr.bf16.mxu0 %v1099
    %1472 = vmatpush1.bf16.msra.mxu0 %v1098
    %1473 = vmatprep.subr.bf16.mxu0 %v1103
    %1474 = vmatpush1.bf16.msra.mxu0 %v1102
    %1475 = vmatprep.subr.bf16.mxu0 %v1107
    %1476 = vmatpush1.bf16.msra.mxu0 %v1106
    %1477 = vmatprep.subr.bf16.mxu0 %v1111
    %1478 = vmatpush1.bf16.msra.mxu0 %v1110
    %1479 = vmatprep.subr.bf16.mxu0 %v1115
    %1480 = vmatpush1.bf16.msra.mxu0 %v1114
    %1481 = vmatprep.subr.bf16.mxu0 %v1119
    %1482 = vmatpush1.bf16.msra.mxu0 %v1118
    %1483 = vmatprep.subr.bf16.mxu0 %v1123
    %1484 = vmatpush1.bf16.msra.mxu0 %v1122
    %1485 = vmatprep.subr.bf16.mxu0 %v1127
    %1486 = vmatpush1.bf16.msra.mxu0 %v1126
    %1487 = vmatprep.subr.bf16.mxu0 %v1131
    %1488 = vmatpush1.bf16.msra.mxu0 %v1130
    %1489 = vmatprep.subr.bf16.mxu0 %v1135
    %1490 = vmatpush1.bf16.msra.mxu0 %v1134
    %1491 = vmatprep.subr.bf16.mxu0 %v1139
    %1492 = vmatpush1.bf16.msra.mxu0 %v1138
    %1493 = vmatprep.subr.bf16.mxu0 %v1143
    %1494 = vmatpush1.bf16.msra.mxu0 %v1142
    %1495 = vmatprep.subr.bf16.mxu0 %v1147
    %1496 = vmatpush1.bf16.msra.mxu0 %v1146
    %1497 = vmatprep.subr.bf16.mxu0 %v1151
    %1498 = vmatpush1.bf16.msra.mxu0 %v1150
    %1499 = vmatprep.subr.bf16.mxu0 %v1155
    %1500 = vmatpush1.bf16.msra.mxu0 %v1154
    %1501 = vmatprep.mubr.bf16.mxu0 %v432
    %1502 = vmatmul.mubr.bf16.gmra.mrb[0].mxu0 %v431
    %v1503 = vpop.f32.mrb[0].mxu0
    %v1504 = vadd.f32 %v1461, %v1503
    %v1505 = vpop.f32.mrb[0].mxu0
    %v1506 = vadd.f32 %v1463, %v1505
    %v1507 = vpop.f32.mrb[0].mxu0
    %v1508 = vadd.f32 %v1465, %v1507
    %v1509 = vpop.f32.mrb[0].mxu0
    %v1510 = vadd.f32 %v1467, %v1509
    %1511 = vdwg.mxu0
    %1512 = vmatprep.subr.bf16.mxu0 %v1159
    %1513 = vmatpush1.bf16.msra.mxu0 %v1158
    %1514 = vmatprep.subr.bf16.mxu0 %v1163
    %1515 = vmatpush1.bf16.msra.mxu0 %v1162
    %1516 = vmatprep.subr.bf16.mxu0 %v1167
    %1517 = vmatpush1.bf16.msra.mxu0 %v1166
    %1518 = vmatprep.subr.bf16.mxu0 %v1171
    %1519 = vmatpush1.bf16.msra.mxu0 %v1170
    %1520 = vmatprep.subr.bf16.mxu0 %v1175
    %1521 = vmatpush1.bf16.msra.mxu0 %v1174
    %1522 = vmatprep.subr.bf16.mxu0 %v1179
    %1523 = vmatpush1.bf16.msra.mxu0 %v1178
    %1524 = vmatprep.subr.bf16.mxu0 %v1183
    %1525 = vmatpush1.bf16.msra.mxu0 %v1182
    %1526 = vmatprep.subr.bf16.mxu0 %v1187
    %1527 = vmatpush1.bf16.msra.mxu0 %v1186
    %1528 = vmatprep.subr.bf16.mxu0 %v1191
    %1529 = vmatpush1.bf16.msra.mxu0 %v1190
    %1530 = vmatprep.subr.bf16.mxu0 %v1195
    %1531 = vmatpush1.bf16.msra.mxu0 %v1194
    %1532 = vmatprep.subr.bf16.mxu0 %v1199
    %1533 = vmatpush1.bf16.msra.mxu0 %v1198
    %1534 = vmatprep.subr.bf16.mxu0 %v1203
    %1535 = vmatpush1.bf16.msra.mxu0 %v1202
    %1536 = vmatprep.subr.bf16.mxu0 %v1207
    %1537 = vmatpush1.bf16.msra.mxu0 %v1206
    %1538 = vmatprep.subr.bf16.mxu0 %v1211
    %1539 = vmatpush1.bf16.msra.mxu0 %v1210
    %1540 = vmatprep.subr.bf16.mxu0 %v1215
    %1541 = vmatpush1.bf16.msra.mxu0 %v1214
    %1542 = vmatprep.subr.bf16.mxu0 %v1219
    %1543 = vmatpush1.bf16.msra.mxu0 %v1218
    %1544 = vmatprep.mubr.bf16.mxu0 %v434
    %1545 = vmatmul.mubr.bf16.gmra.mrb[0].mxu0 %v433
    %v1546 = vpop.f32.mrb[0].mxu0
    %v1547 = vadd.f32 %v1504, %v1546
    %v1548 = vpop.f32.mrb[0].mxu0
    %v1549 = vadd.f32 %v1506, %v1548
    %v1550 = vpop.f32.mrb[0].mxu0
    %v1551 = vadd.f32 %v1508, %v1550
    %v1552 = vpop.f32.mrb[0].mxu0
    %v1553 = vadd.f32 %v1510, %v1552
    %1554 = vdwg.mxu0
    %1555 = vmatprep.subr.bf16.mxu0 %v1223
    %1556 = vmatpush1.bf16.msra.mxu0 %v1222
    %1557 = vmatprep.subr.bf16.mxu0 0
    %1558 = vmatpush1.bf16.msra.mxu0 0
    %1559 = vmatprep.subr.bf16.mxu0 0
    %1560 = vmatpush1.bf16.msra.mxu0 0
    %1561 = vmatprep.subr.bf16.mxu0 0
    %1562 = vmatpush1.bf16.msra.mxu0 0
    %1563 = vmatprep.subr.bf16.mxu0 0
    %1564 = vmatpush1.bf16.msra.mxu0 0
    %1565 = vmatprep.subr.bf16.mxu0 0
    %1566 = vmatpush1.bf16.msra.mxu0 0
    %1567 = vmatprep.subr.bf16.mxu0 0
    %1568 = vmatpush1.bf16.msra.mxu0 0
    %1569 = vmatprep.subr.bf16.mxu0 0
    %1570 = vmatpush1.bf16.msra.mxu0 0
    %1571 = vmatprep.subr.bf16.mxu0 0
    %1572 = vmatpush1.bf16.msra.mxu0 0
    %1573 = vmatprep.subr.bf16.mxu0 0
    %1574 = vmatpush1.bf16.msra.mxu0 0
    %1575 = vmatprep.subr.bf16.mxu0 0
    %1576 = vmatpush1.bf16.msra.mxu0 0
    %1577 = vmatprep.subr.bf16.mxu0 0
    %1578 = vmatpush1.bf16.msra.mxu0 0
    %1579 = vmatprep.subr.bf16.mxu0 0
    %1580 = vmatpush1.bf16.msra.mxu0 0
    %1581 = vmatprep.subr.bf16.mxu0 0
    %1582 = vmatpush1.bf16.msra.mxu0 0
    %1583 = vmatprep.subr.bf16.mxu0 0
    %1584 = vmatpush1.bf16.msra.mxu0 0
    %1585 = vmatprep.subr.bf16.mxu0 0
    %1586 = vmatpush1.bf16.msra.mxu0 0
    %1587 = vmatprep.mubr.bf16.mxu0 0
    %1588 = vmatmul.mubr.bf16.gmra.mrb[0].mxu0 %v1424
    %v1589 = vpop.f32.mrb[0].mxu0
    %v1590 = vadd.f32 %v1547, %v1589
    %v1591 = vpop.f32.mrb[0].mxu0
    %v1592 = vadd.f32 %v1549, %v1591
    %v1593 = vpop.f32.mrb[0].mxu0
    %v1594 = vadd.f32 %v1551, %v1593
    %v1595 = vpop.f32.mrb[0].mxu0
    %v1596 = vadd.f32 %v1553, %v1595
    %1597 = vdwg.mxu0
    %1598 = vmatprep.subr.bf16.mxu0 %v1033
    %1599 = vmatpush1.bf16.msra.mxu0 %v1032
    %1600 = vmatprep.subr.bf16.mxu0 %v1037
    %1601 = vmatpush1.bf16.msra.mxu0 %v1036
    %1602 = vmatprep.subr.bf16.mxu0 %v1041
    %1603 = vmatpush1.bf16.msra.mxu0 %v1040
    %1604 = vmatprep.subr.bf16.mxu0 %v1045
    %1605 = vmatpush1.bf16.msra.mxu0 %v1044
    %1606 = vmatprep.subr.bf16.mxu0 %v1049
    %1607 = vmatpush1.bf16.msra.mxu0 %v1048
    %1608 = vmatprep.subr.bf16.mxu0 %v1053
    %1609 = vmatpush1.bf16.msra.mxu0 %v1052
    %1610 = vmatprep.subr.bf16.mxu0 %v1057
    %1611 = vmatpush1.bf16.msra.mxu0 %v1056
    %1612 = vmatprep.subr.bf16.mxu0 %v1061
    %1613 = vmatpush1.bf16.msra.mxu0 %v1060
    %1614 = vmatprep.subr.bf16.mxu0 %v1065
    %1615 = vmatpush1.bf16.msra.mxu0 %v1064
    %1616 = vmatprep.subr.bf16.mxu0 %v1069
    %1617 = vmatpush1.bf16.msra.mxu0 %v1068
    %1618 = vmatprep.subr.bf16.mxu0 %v1073
    %1619 = vmatpush1.bf16.msra.mxu0 %v1072
    %1620 = vmatprep.subr.bf16.mxu0 %v1077
    %1621 = vmatpush1.bf16.msra.mxu0 %v1076
    %1622 = vmatprep.subr.bf16.mxu0 %v1081
    %1623 = vmatpush1.bf16.msra.mxu0 %v1080
    %1624 = vmatprep.subr.bf16.mxu0 %v1085
    %1625 = vmatpush1.bf16.msra.mxu0 %v1084
    %1626 = vmatprep.subr.bf16.mxu0 %v1089
    %1627 = vmatpush1.bf16.msra.mxu0 %v1088
    %1628 = vmatprep.subr.bf16.mxu0 %v1093
    %1629 = vmatpush1.bf16.msra.mxu0 %v1092
    %1630 = vmatprep.mubr.bf16.mxu0 %v430
    %1631 = vmatmul.mubr.bf16.gmra.mrb[0].mxu0 %v429
    %v1632 = vpop.f32.mrb[0].mxu0
    %v1633 = vadd.f32 %v398, %v1632
    %v1634 = vpop.f32.mrb[0].mxu0
    %v1635 = vadd.f32 %v402, %v1634
    %v1636 = vpop.f32.mrb[0].mxu0
    %v1637 = vadd.f32 %v398, %v1636
    %v1638 = vpop.f32.mrb[0].mxu0
    %v1639 = vadd.f32 %v402, %v1638
    %1640 = vdwg.mxu0
    %1641 = vmatprep.subr.bf16.mxu0 %v1097
    %1642 = vmatpush1.bf16.msra.mxu0 %v1096
    %1643 = vmatprep.subr.bf16.mxu0 %v1101
    %1644 = vmatpush1.bf16.msra.mxu0 %v1100
    %1645 = vmatprep.subr.bf16.mxu0 %v1105
    %1646 = vmatpush1.bf16.msra.mxu0 %v1104
    %1647 = vmatprep.subr.bf16.mxu0 %v1109
    %1648 = vmatpush1.bf16.msra.mxu0 %v1108
    %1649 = vmatprep.subr.bf16.mxu0 %v1113
    %1650 = vmatpush1.bf16.msra.mxu0 %v1112
    %1651 = vmatprep.subr.bf16.mxu0 %v1117
    %1652 = vmatpush1.bf16.msra.mxu0 %v1116
    %1653 = vmatprep.subr.bf16.mxu0 %v1121
    %1654 = vmatpush1.bf16.msra.mxu0 %v1120
    %1655 = vmatprep.subr.bf16.mxu0 %v1125
    %1656 = vmatpush1.bf16.msra.mxu0 %v1124
    %1657 = vmatprep.subr.bf16.mxu0 %v1129
    %1658 = vmatpush1.bf16.msra.mxu0 %v1128
    %1659 = vmatprep.subr.bf16.mxu0 %v1133
    %1660 = vmatpush1.bf16.msra.mxu0 %v1132
    %1661 = vmatprep.subr.bf16.mxu0 %v1137
    %1662 = vmatpush1.bf16.msra.mxu0 %v1136
    %1663 = vmatprep.subr.bf16.mxu0 %v1141
    %1664 = vmatpush1.bf16.msra.mxu0 %v1140
    %1665 = vmatprep.subr.bf16.mxu0 %v1145
    %1666 = vmatpush1.bf16.msra.mxu0 %v1144
    %1667 = vmatprep.subr.bf16.mxu0 %v1149
    %1668 = vmatpush1.bf16.msra.mxu0 %v1148
    %1669 = vmatprep.subr.bf16.mxu0 %v1153
    %1670 = vmatpush1.bf16.msra.mxu0 %v1152
    %1671 = vmatprep.subr.bf16.mxu0 %v1157
    %1672 = vmatpush1.bf16.msra.mxu0 %v1156
    %1673 = vmatprep.mubr.bf16.mxu0 %v432
    %1674 = vmatmul.mubr.bf16.gmra.mrb[0].mxu0 %v431
    %v1675 = vpop.f32.mrb[0].mxu0
    %v1676 = vadd.f32 %v1633, %v1675
    %v1677 = vpop.f32.mrb[0].mxu0
    %v1678 = vadd.f32 %v1635, %v1677
    %v1679 = vpop.f32.mrb[0].mxu0
    %v1680 = vadd.f32 %v1637, %v1679
    %v1681 = vpop.f32.mrb[0].mxu0
    %v1682 = vadd.f32 %v1639, %v1681
    %1683 = vdwg.mxu0
    %1684 = vmatprep.subr.bf16.mxu0 %v1161
    %1685 = vmatpush1.bf16.msra.mxu0 %v1160
    %1686 = vmatprep.subr.bf16.mxu0 %v1165
    %1687 = vmatpush1.bf16.msra.mxu0 %v1164
    %1688 = vmatprep.subr.bf16.mxu0 %v1169
    %1689 = vmatpush1.bf16.msra.mxu0 %v1168
    %1690 = vmatprep.subr.bf16.mxu0 %v1173
    %1691 = vmatpush1.bf16.msra.mxu0 %v1172
    %1692 = vmatprep.subr.bf16.mxu0 %v1177
    %1693 = vmatpush1.bf16.msra.mxu0 %v1176
    %1694 = vmatprep.subr.bf16.mxu0 %v1181
    %1695 = vmatpush1.bf16.msra.mxu0 %v1180
    %1696 = vmatprep.subr.bf16.mxu0 %v1185
    %1697 = vmatpush1.bf16.msra.mxu0 %v1184
    %1698 = vmatprep.subr.bf16.mxu0 %v1189
    %1699 = vmatpush1.bf16.msra.mxu0 %v1188
    %1700 = vmatprep.subr.bf16.mxu0 %v1193
    %1701 = vmatpush1.bf16.msra.mxu0 %v1192
    %1702 = vmatprep.subr.bf16.mxu0 %v1197
    %1703 = vmatpush1.bf16.msra.mxu0 %v1196
    %1704 = vmatprep.subr.bf16.mxu0 %v1201
    %1705 = vmatpush1.bf16.msra.mxu0 %v1200
    %1706 = vmatprep.subr.bf16.mxu0 %v1205
    %1707 = vmatpush1.bf16.msra.mxu0 %v1204
    %1708 = vmatprep.subr.bf16.mxu0 %v1209
    %1709 = vmatpush1.bf16.msra.mxu0 %v1208
    %1710 = vmatprep.subr.bf16.mxu0 %v1213
    %1711 = vmatpush1.bf16.msra.mxu0 %v1212
    %1712 = vmatprep.subr.bf16.mxu0 %v1217
    %1713 = vmatpush1.bf16.msra.mxu0 %v1216
    %1714 = vmatprep.subr.bf16.mxu0 %v1221
    %1715 = vmatpush1.bf16.msra.mxu0 %v1220
    %1716 = vmatprep.mubr.bf16.mxu0 %v434
    %1717 = vmatmul.mubr.bf16.gmra.mrb[0].mxu0 %v433
    %v1718 = vpop.f32.mrb[0].mxu0
    %v1719 = vadd.f32 %v1676, %v1718
    %v1720 = vpop.f32.mrb[0].mxu0
    %v1721 = vadd.f32 %v1678, %v1720
    %v1722 = vpop.f32.mrb[0].mxu0
    %v1723 = vadd.f32 %v1680, %v1722
    %v1724 = vpop.f32.mrb[0].mxu0
    %v1725 = vadd.f32 %v1682, %v1724
    %1726 = vdwg.mxu0
    %1727 = vmatprep.subr.bf16.mxu0 %v1225
    %1728 = vmatpush1.bf16.msra.mxu0 %v1224
    %1729 = vmatprep.subr.bf16.mxu0 0
    %1730 = vmatpush1.bf16.msra.mxu0 0
    %1731 = vmatprep.subr.bf16.mxu0 0
    %1732 = vmatpush1.bf16.msra.mxu0 0
    %1733 = vmatprep.subr.bf16.mxu0 0
    %1734 = vmatpush1.bf16.msra.mxu0 0
    %1735 = vmatprep.subr.bf16.mxu0 0
    %1736 = vmatpush1.bf16.msra.mxu0 0
    %1737 = vmatprep.subr.bf16.mxu0 0
    %1738 = vmatpush1.bf16.msra.mxu0 0
    %1739 = vmatprep.subr.bf16.mxu0 0
    %1740 = vmatpush1.bf16.msra.mxu0 0
    %1741 = vmatprep.subr.bf16.mxu0 0
    %1742 = vmatpush1.bf16.msra.mxu0 0
    %1743 = vmatprep.subr.bf16.mxu0 0
    %1744 = vmatpush1.bf16.msra.mxu0 0
    %1745 = vmatprep.subr.bf16.mxu0 0
    %1746 = vmatpush1.bf16.msra.mxu0 0
    %1747 = vmatprep.subr.bf16.mxu0 0
    %1748 = vmatpush1.bf16.msra.mxu0 0
    %1749 = vmatprep.subr.bf16.mxu0 0
    %1750 = vmatpush1.bf16.msra.mxu0 0
    %1751 = vmatprep.subr.bf16.mxu0 0
    %1752 = vmatpush1.bf16.msra.mxu0 0
    %1753 = vmatprep.subr.bf16.mxu0 0
    %1754 = vmatpush1.bf16.msra.mxu0 0
    %1755 = vmatprep.subr.bf16.mxu0 0
    %1756 = vmatpush1.bf16.msra.mxu0 0
    %1757 = vmatprep.subr.bf16.mxu0 0
    %1758 = vmatpush1.bf16.msra.mxu0 0
    %1759 = vmatprep.mubr.bf16.mxu0 0
    %1760 = vmatmul.mubr.bf16.gmra.mrb[0].mxu0 %v1424
    %v1761 = vpop.f32.mrb[0].mxu0
    %v1762 = vadd.f32 %v1719, %v1761
    %v1763 = vpop.f32.mrb[0].mxu0
    %v1764 = vadd.f32 %v1721, %v1763
    %v1765 = vpop.f32.mrb[0].mxu0
    %v1766 = vadd.f32 %v1723, %v1765
    %v1767 = vpop.f32.mrb[0].mxu0
    %v1768 = vadd.f32 %v1725, %v1767
    %1769 = vdwg.mxu0
    %v1770 = vmax.f32 %v1590, 0.0
    %v1771 = vmax.f32 %v1592, 0.0
    %v1772 = vmax.f32 %v1762, 0.0
    %v1773 = vmax.f32 %v1764, 0.0
    %v1774 = vmax.f32 %v1594, 0.0
    %v1775 = vmax.f32 %v1596, 0.0
    %v1776 = vmax.f32 %v1766, 0.0
    %v1777 = vmax.f32 %v1768, 0.0
    %v1778 = vpack.c.bf16 %v1774, %v1770
    %v1779 = vpack.c.bf16 %v1775, %v1771
    %v1780 = vpack.c.bf16 %v1776, %v1772
    %v1781 = vpack.c.bf16 %v1777, %v1773
    %v1783 = vlaneseq
    %v1784 = vshrl.u32 %v1783, 7
    %v1785 = vsub.s32 0, %v1784
    %v1786 = vrot.slane %v344, %v1785
    %v1787 = vlaneseq
    %v1788 = vshrl.u32 %v1787, 7
    %v1789 = vsub.s32 1, %v1788
    %v1790 = vrot.slane %v344, %v1789
    %v1857 = vunpack.c.l.b16 %v280
    %v1858 = vunpack.c.h.b16 %v280
    %v1859 = vunpack.c.l.b16 %v281
    %v1860 = vunpack.c.h.b16 %v281
    %v1861 = vunpack.c.l.b16 %v282
    %v1862 = vunpack.c.h.b16 %v282
    %v1863 = vunpack.c.l.b16 %v283
    %v1864 = vunpack.c.h.b16 %v283
    %v1865 = vunpack.c.l.b16 %v284
    %v1866 = vunpack.c.h.b16 %v284
    %v1867 = vunpack.c.l.b16 %v285
    %v1868 = vunpack.c.h.b16 %v285
    %v1869 = vunpack.c.l.b16 %v286
    %v1870 = vunpack.c.h.b16 %v286
    %v1871 = vunpack.c.l.b16 %v287
    %v1872 = vunpack.c.h.b16 %v287
    %v1873 = vunpack.c.l.b16 %v288
    %v1874 = vunpack.c.h.b16 %v288
    %v1875 = vunpack.c.l.b16 %v289
    %v1876 = vunpack.c.h.b16 %v289
    %v1877 = vunpack.c.l.b16 %v290
    %v1878 = vunpack.c.h.b16 %v290
    %v1879 = vunpack.c.l.b16 %v291
    %v1880 = vunpack.c.h.b16 %v291
    %v1881 = vunpack.c.l.b16 %v292
    %v1882 = vunpack.c.h.b16 %v292
    %v1883 = vunpack.c.l.b16 %v293
    %v1884 = vunpack.c.h.b16 %v293
    %v1885 = vunpack.c.l.b16 %v294
    %v1886 = vunpack.c.h.b16 %v294
    %v1887 = vunpack.c.l.b16 %v295
    %v1888 = vunpack.c.h.b16 %v295
    %v1889 = vunpack.c.l.b16 %v296
    %v1890 = vunpack.c.h.b16 %v296
    %v1891 = vunpack.c.l.b16 %v297
    %v1892 = vunpack.c.h.b16 %v297
    %v1893 = vunpack.c.l.b16 %v298
    %v1894 = vunpack.c.h.b16 %v298
    %v1895 = vunpack.c.l.b16 %v299
    %v1896 = vunpack.c.h.b16 %v299
    %v1897 = vunpack.c.l.b16 %v300
    %v1898 = vunpack.c.h.b16 %v300
    %v1899 = vunpack.c.l.b16 %v301
    %v1900 = vunpack.c.h.b16 %v301
    %v1901 = vunpack.c.l.b16 %v302
    %v1902 = vunpack.c.h.b16 %v302
    %v1903 = vunpack.c.l.b16 %v303
    %v1904 = vunpack.c.h.b16 %v303
    %v1905 = vunpack.c.l.b16 %v304
    %v1906 = vunpack.c.h.b16 %v304
    %v1907 = vunpack.c.l.b16 %v305
    %v1908 = vunpack.c.h.b16 %v305
    %v1909 = vunpack.c.l.b16 %v306
    %v1910 = vunpack.c.h.b16 %v306
    %v1911 = vunpack.c.l.b16 %v307
    %v1912 = vunpack.c.h.b16 %v307
    %v1913 = vunpack.c.l.b16 %v308
    %v1914 = vunpack.c.h.b16 %v308
    %v1915 = vunpack.c.l.b16 %v309
    %v1916 = vunpack.c.h.b16 %v309
    %v1917 = vunpack.c.l.b16 %v310
    %v1918 = vunpack.c.h.b16 %v310
    %v1919 = vunpack.c.l.b16 %v311
    %v1920 = vunpack.c.h.b16 %v311
    %v1921 = vunpack.c.l.b16 %v312
    %v1922 = vunpack.c.h.b16 %v312
    %v1923 = vunpack.c.l.b16 %v313
    %v1924 = vunpack.c.h.b16 %v313
    %v1925 = vunpack.c.l.b16 %v314
    %v1926 = vunpack.c.h.b16 %v314
    %v1927 = vunpack.c.l.b16 %v315
    %v1928 = vunpack.c.h.b16 %v315
    %v1929 = vunpack.c.l.b16 %v316
    %v1930 = vunpack.c.h.b16 %v316
    %v1931 = vunpack.c.l.b16 %v317
    %v1932 = vunpack.c.h.b16 %v317
    %v1933 = vunpack.c.l.b16 %v318
    %v1934 = vunpack.c.h.b16 %v318
    %v1935 = vunpack.c.l.b16 %v319
    %v1936 = vunpack.c.h.b16 %v319
    %v1937 = vunpack.c.l.b16 %v320
    %v1938 = vunpack.c.h.b16 %v320
    %v1939 = vunpack.c.l.b16 %v321
    %v1940 = vunpack.c.h.b16 %v321
    %v1941 = vunpack.c.l.b16 %v322
    %v1942 = vunpack.c.h.b16 %v322
    %v1943 = vunpack.c.l.b16 %v323
    %v1944 = vunpack.c.h.b16 %v323
    %v1945 = vunpack.c.l.b16 %v324
    %v1946 = vunpack.c.h.b16 %v324
    %v1947 = vunpack.c.l.b16 %v325
    %v1948 = vunpack.c.h.b16 %v325
    %v1949 = vunpack.c.l.b16 %v326
    %v1950 = vunpack.c.h.b16 %v326
    %v1951 = vunpack.c.l.b16 %v327
    %v1952 = vunpack.c.h.b16 %v327
    %v1953 = vunpack.c.l.b16 %v328
    %v1954 = vunpack.c.h.b16 %v328
    %v1955 = vunpack.c.l.b16 %v329
    %v1956 = vunpack.c.h.b16 %v329
    %v1957 = vunpack.c.l.b16 %v330
    %v1958 = vunpack.c.h.b16 %v330
    %v1959 = vunpack.c.l.b16 %v331
    %v1960 = vunpack.c.h.b16 %v331
    %v1961 = vunpack.c.l.b16 %v332
    %v1962 = vunpack.c.h.b16 %v332
    %v1963 = vunpack.c.l.b16 %v333
    %v1964 = vunpack.c.h.b16 %v333
    %v1965 = vunpack.c.l.b16 %v334
    %v1966 = vunpack.c.h.b16 %v334
    %v1967 = vunpack.c.l.b16 %v335
    %v1968 = vunpack.c.h.b16 %v335
    %v1969 = vunpack.c.l.b16 %v336
    %v1970 = vunpack.c.h.b16 %v336
    %v1971 = vunpack.c.l.b16 %v337
    %v1972 = vunpack.c.h.b16 %v337
    %v1973 = vunpack.c.l.b16 %v338
    %v1974 = vunpack.c.h.b16 %v338
    %v1975 = vunpack.c.l.b16 %v339
    %v1976 = vunpack.c.h.b16 %v339
    %v1977 = vunpack.c.l.b16 %v340
    %v1978 = vunpack.c.h.b16 %v340
    %v1979 = vunpack.c.l.b16 %v341
    %v1980 = vunpack.c.h.b16 %v341
    %v1981 = vunpack.c.l.b16 %v342
    %v1982 = vunpack.c.h.b16 %v342
    %v1983 = vunpack.c.l.b16 %v343
    %v1984 = vunpack.c.h.b16 %v343
    %v1985 = vpack.c.b16 %v1859, %v1857
    %v1986 = vpack.c.b16 %v1860, %v1858
    %v1987 = vpack.c.b16 %v1863, %v1861
    %v1988 = vpack.c.b16 %v1864, %v1862
    %v1989 = vpack.c.b16 %v1867, %v1865
    %v1990 = vpack.c.b16 %v1868, %v1866
    %v1991 = vpack.c.b16 %v1871, %v1869
    %v1992 = vpack.c.b16 %v1872, %v1870
    %v1993 = vpack.c.b16 %v1875, %v1873
    %v1994 = vpack.c.b16 %v1876, %v1874
    %v1995 = vpack.c.b16 %v1879, %v1877
    %v1996 = vpack.c.b16 %v1880, %v1878
    %v1997 = vpack.c.b16 %v1883, %v1881
    %v1998 = vpack.c.b16 %v1884, %v1882
    %v1999 = vpack.c.b16 %v1887, %v1885
    %v2000 = vpack.c.b16 %v1888, %v1886
    %v2001 = vpack.c.b16 %v1891, %v1889
    %v2002 = vpack.c.b16 %v1892, %v1890
    %v2003 = vpack.c.b16 %v1895, %v1893
    %v2004 = vpack.c.b16 %v1896, %v1894
    %v2005 = vpack.c.b16 %v1899, %v1897
    %v2006 = vpack.c.b16 %v1900, %v1898
    %v2007 = vpack.c.b16 %v1903, %v1901
    %v2008 = vpack.c.b16 %v1904, %v1902
    %v2009 = vpack.c.b16 %v1907, %v1905
    %v2010 = vpack.c.b16 %v1908, %v1906
    %v2011 = vpack.c.b16 %v1911, %v1909
    %v2012 = vpack.c.b16 %v1912, %v1910
    %v2013 = vpack.c.b16 %v1915, %v1913
    %v2014 = vpack.c.b16 %v1916, %v1914
    %v2015 = vpack.c.b16 %v1919, %v1917
    %v2016 = vpack.c.b16 %v1920, %v1918
    %v2017 = vpack.c.b16 %v1923, %v1921
    %v2018 = vpack.c.b16 %v1924, %v1922
    %v2019 = vpack.c.b16 %v1927, %v1925
    %v2020 = vpack.c.b16 %v1928, %v1926
    %v2021 = vpack.c.b16 %v1931, %v1929
    %v2022 = vpack.c.b16 %v1932, %v1930
    %v2023 = vpack.c.b16 %v1935, %v1933
    %v2024 = vpack.c.b16 %v1936, %v1934
    %v2025 = vpack.c.b16 %v1939, %v1937
    %v2026 = vpack.c.b16 %v1940, %v1938
    %v2027 = vpack.c.b16 %v1943, %v1941
    %v2028 = vpack.c.b16 %v1944, %v1942
    %v2029 = vpack.c.b16 %v1947, %v1945
    %v2030 = vpack.c.b16 %v1948, %v1946
    %v2031 = vpack.c.b16 %v1951, %v1949
    %v2032 = vpack.c.b16 %v1952, %v1950
    %v2033 = vpack.c.b16 %v1955, %v1953
    %v2034 = vpack.c.b16 %v1956, %v1954
    %v2035 = vpack.c.b16 %v1959, %v1957
    %v2036 = vpack.c.b16 %v1960, %v1958
    %v2037 = vpack.c.b16 %v1963, %v1961
    %v2038 = vpack.c.b16 %v1964, %v1962
    %v2039 = vpack.c.b16 %v1967, %v1965
    %v2040 = vpack.c.b16 %v1968, %v1966
    %v2041 = vpack.c.b16 %v1971, %v1969
    %v2042 = vpack.c.b16 %v1972, %v1970
    %v2043 = vpack.c.b16 %v1975, %v1973
    %v2044 = vpack.c.b16 %v1976, %v1974
    %v2045 = vpack.c.b16 %v1979, %v1977
    %v2046 = vpack.c.b16 %v1980, %v1978
    %v2047 = vpack.c.b16 %v1983, %v1981
    %v2048 = vpack.c.b16 %v1984, %v1982
    %2113 = vmatprep.subr.bf16.mxu0 %v1986
    %2114 = vmatpush1.bf16.msra.mxu0 %v1985
    %2115 = vmatprep.subr.bf16.mxu0 %v1988
    %2116 = vmatpush1.bf16.msra.mxu0 %v1987
    %2117 = vmatprep.subr.bf16.mxu0 %v1990
    %2118 = vmatpush1.bf16.msra.mxu0 %v1989
    %2119 = vmatprep.subr.bf16.mxu0 %v1992
    %2120 = vmatpush1.bf16.msra.mxu0 %v1991
    %2121 = vmatprep.subr.bf16.mxu0 %v1994
    %2122 = vmatpush1.bf16.msra.mxu0 %v1993
    %2123 = vmatprep.subr.bf16.mxu0 %v1996
    %2124 = vmatpush1.bf16.msra.mxu0 %v1995
    %2125 = vmatprep.subr.bf16.mxu0 %v1998
    %2126 = vmatpush1.bf16.msra.mxu0 %v1997
    %2127 = vmatprep.subr.bf16.mxu0 %v2000
    %2128 = vmatpush1.bf16.msra.mxu0 %v1999
    %2129 = vmatprep.subr.bf16.mxu0 %v2002
    %2130 = vmatpush1.bf16.msra.mxu0 %v2001
    %2131 = vmatprep.subr.bf16.mxu0 %v2004
    %2132 = vmatpush1.bf16.msra.mxu0 %v2003
    %2133 = vmatprep.subr.bf16.mxu0 %v2006
    %2134 = vmatpush1.bf16.msra.mxu0 %v2005
    %2135 = vmatprep.subr.bf16.mxu0 %v2008
    %2136 = vmatpush1.bf16.msra.mxu0 %v2007
    %2137 = vmatprep.subr.bf16.mxu0 %v2010
    %2138 = vmatpush1.bf16.msra.mxu0 %v2009
    %2139 = vmatprep.subr.bf16.mxu0 %v2012
    %2140 = vmatpush1.bf16.msra.mxu0 %v2011
    %2141 = vmatprep.subr.bf16.mxu0 %v2014
    %2142 = vmatpush1.bf16.msra.mxu0 %v2013
    %2143 = vmatprep.subr.bf16.mxu0 %v2016
    %2144 = vmatpush1.bf16.msra.mxu0 %v2015
    %2145 = vmatprep.mubr.bf16.mxu0 %v1779
    %2146 = vmatmul.mubr.bf16.gmra.mrb[0].mxu0 %v1778
    %v2147 = vpop.f32.mrb[0].mxu0
    %v2148 = vadd.f32 %v1786, %v2147
    %v2149 = vpop.f32.mrb[0].mxu0
    %v2150 = vadd.f32 %v1790, %v2149
    %v2151 = vpop.f32.mrb[0].mxu0
    %v2152 = vadd.f32 %v1786, %v2151
    %v2153 = vpop.f32.mrb[0].mxu0
    %v2154 = vadd.f32 %v1790, %v2153
    %2155 = vdwg.mxu0
    %2156 = vmatprep.subr.bf16.mxu0 %v2018
    %2157 = vmatpush1.bf16.msra.mxu0 %v2017
    %2158 = vmatprep.subr.bf16.mxu0 %v2020
    %2159 = vmatpush1.bf16.msra.mxu0 %v2019
    %2160 = vmatprep.subr.bf16.mxu0 %v2022
    %2161 = vmatpush1.bf16.msra.mxu0 %v2021
    %2162 = vmatprep.subr.bf16.mxu0 %v2024
    %2163 = vmatpush1.bf16.msra.mxu0 %v2023
    %2164 = vmatprep.subr.bf16.mxu0 %v2026
    %2165 = vmatpush1.bf16.msra.mxu0 %v2025
    %2166 = vmatprep.subr.bf16.mxu0 %v2028
    %2167 = vmatpush1.bf16.msra.mxu0 %v2027
    %2168 = vmatprep.subr.bf16.mxu0 %v2030
    %2169 = vmatpush1.bf16.msra.mxu0 %v2029
    %2170 = vmatprep.subr.bf16.mxu0 %v2032
    %2171 = vmatpush1.bf16.msra.mxu0 %v2031
    %2172 = vmatprep.subr.bf16.mxu0 %v2034
    %2173 = vmatpush1.bf16.msra.mxu0 %v2033
    %2174 = vmatprep.subr.bf16.mxu0 %v2036
    %2175 = vmatpush1.bf16.msra.mxu0 %v2035
    %2176 = vmatprep.subr.bf16.mxu0 %v2038
    %2177 = vmatpush1.bf16.msra.mxu0 %v2037
    %2178 = vmatprep.subr.bf16.mxu0 %v2040
    %2179 = vmatpush1.bf16.msra.mxu0 %v2039
    %2180 = vmatprep.subr.bf16.mxu0 %v2042
    %2181 = vmatpush1.bf16.msra.mxu0 %v2041
    %2182 = vmatprep.subr.bf16.mxu0 %v2044
    %2183 = vmatpush1.bf16.msra.mxu0 %v2043
    %2184 = vmatprep.subr.bf16.mxu0 %v2046
    %2185 = vmatpush1.bf16.msra.mxu0 %v2045
    %2186 = vmatprep.subr.bf16.mxu0 %v2048
    %2187 = vmatpush1.bf16.msra.mxu0 %v2047
    %2188 = vmatprep.mubr.bf16.mxu0 %v1781
    %2189 = vmatmul.mubr.bf16.gmra.mrb[0].mxu0 %v1780
    %v2190 = vpop.f32.mrb[0].mxu0
    %v2191 = vadd.f32 %v2148, %v2190
    %v2192 = vpop.f32.mrb[0].mxu0
    %v2193 = vadd.f32 %v2150, %v2192
    %v2194 = vpop.f32.mrb[0].mxu0
    %v2195 = vadd.f32 %v2152, %v2194
    %v2196 = vpop.f32.mrb[0].mxu0
    %v2197 = vadd.f32 %v2154, %v2196
    %2198 = vdwg.mxu0
    %v2199 = vmax.f32 %v2191, 0.0
    %v2200 = vmax.f32 %v2193, 0.0
    %v2201 = vmax.f32 %v2195, 0.0
    %v2202 = vmax.f32 %v2197, 0.0
    %v2203 = vpack.c.bf16 %v2201, %v2199
    %v2204 = vpack.c.bf16 %v2202, %v2200
    %v2206 = vlaneseq
    %v2207 = vshrl.u32 %v2206, 7
    %v2208 = vsub.s32 0, %v2207
    %v2209 = vrot.slane %v377, %v2208
    %v2243 = vunpack.c.l.b16 %v345
    %v2244 = vunpack.c.l.b16 %v346
    %v2245 = vunpack.c.l.b16 %v347
    %v2246 = vunpack.c.l.b16 %v348
    %v2247 = vunpack.c.l.b16 %v349
    %v2248 = vunpack.c.l.b16 %v350
    %v2249 = vunpack.c.l.b16 %v351
    %v2250 = vunpack.c.l.b16 %v352
    %v2251 = vunpack.c.l.b16 %v353
    %v2252 = vunpack.c.l.b16 %v354
    %v2253 = vunpack.c.l.b16 %v355
    %v2254 = vunpack.c.l.b16 %v356
    %v2255 = vunpack.c.l.b16 %v357
    %v2256 = vunpack.c.l.b16 %v358
    %v2257 = vunpack.c.l.b16 %v359
    %v2258 = vunpack.c.l.b16 %v360
    %v2259 = vunpack.c.l.b16 %v361
    %v2260 = vunpack.c.l.b16 %v362
    %v2261 = vunpack.c.l.b16 %v363
    %v2262 = vunpack.c.l.b16 %v364
    %v2263 = vunpack.c.l.b16 %v365
    %v2264 = vunpack.c.l.b16 %v366
    %v2265 = vunpack.c.l.b16 %v367
    %v2266 = vunpack.c.l.b16 %v368
    %v2267 = vunpack.c.l.b16 %v369
    %v2268 = vunpack.c.l.b16 %v370
    %v2269 = vunpack.c.l.b16 %v371
    %v2270 = vunpack.c.l.b16 %v372
    %v2271 = vunpack.c.l.b16 %v373
    %v2272 = vunpack.c.l.b16 %v374
    %v2273 = vunpack.c.l.b16 %v375
    %v2274 = vunpack.c.l.b16 %v376
    %v2275 = vpack.c.b16 %v2244, %v2243
    %v2276 = vpack.c.b16 %v2246, %v2245
    %v2277 = vpack.c.b16 %v2248, %v2247
    %v2278 = vpack.c.b16 %v2250, %v2249
    %v2279 = vpack.c.b16 %v2252, %v2251
    %v2280 = vpack.c.b16 %v2254, %v2253
    %v2281 = vpack.c.b16 %v2256, %v2255
    %v2282 = vpack.c.b16 %v2258, %v2257
    %v2283 = vpack.c.b16 %v2260, %v2259
    %v2284 = vpack.c.b16 %v2262, %v2261
    %v2285 = vpack.c.b16 %v2264, %v2263
    %v2286 = vpack.c.b16 %v2266, %v2265
    %v2287 = vpack.c.b16 %v2268, %v2267
    %v2288 = vpack.c.b16 %v2270, %v2269
    %v2289 = vpack.c.b16 %v2272, %v2271
    %v2290 = vpack.c.b16 %v2274, %v2273
    %2307 = vmatprep.subr.bf16.mxu0 0
    %2308 = vmatpush1.bf16.msra.mxu0 %v2275
    %2309 = vmatprep.subr.bf16.mxu0 0
    %2310 = vmatpush1.bf16.msra.mxu0 %v2276
    %2311 = vmatprep.subr.bf16.mxu0 0
    %2312 = vmatpush1.bf16.msra.mxu0 %v2277
    %2313 = vmatprep.subr.bf16.mxu0 0
    %2314 = vmatpush1.bf16.msra.mxu0 %v2278
    %2315 = vmatprep.subr.bf16.mxu0 0
    %2316 = vmatpush1.bf16.msra.mxu0 %v2279
    %2317 = vmatprep.subr.bf16.mxu0 0
    %2318 = vmatpush1.bf16.msra.mxu0 %v2280
    %2319 = vmatprep.subr.bf16.mxu0 0
    %2320 = vmatpush1.bf16.msra.mxu0 %v2281
    %2321 = vmatprep.subr.bf16.mxu0 0
    %2322 = vmatpush1.bf16.msra.mxu0 %v2282
    %2323 = vmatprep.subr.bf16.mxu0 0
    %2324 = vmatpush1.bf16.msra.mxu0 %v2283
    %2325 = vmatprep.subr.bf16.mxu0 0
    %2326 = vmatpush1.bf16.msra.mxu0 %v2284
    %2327 = vmatprep.subr.bf16.mxu0 0
    %2328 = vmatpush1.bf16.msra.mxu0 %v2285
    %2329 = vmatprep.subr.bf16.mxu0 0
    %2330 = vmatpush1.bf16.msra.mxu0 %v2286
    %2331 = vmatprep.subr.bf16.mxu0 0
    %2332 = vmatpush1.bf16.msra.mxu0 %v2287
    %2333 = vmatprep.subr.bf16.mxu0 0
    %2334 = vmatpush1.bf16.msra.mxu0 %v2288
    %2335 = vmatprep.subr.bf16.mxu0 0
    %2336 = vmatpush1.bf16.msra.mxu0 %v2289
    %2337 = vmatprep.subr.bf16.mxu0 0
    %2338 = vmatpush1.bf16.msra.mxu0 %v2290
    %2339 = vmatprep.mubr.bf16.mxu0 %v2204
    %2340 = vmatmul.mubr.bf16.gmra.mrb[0].mxu0 %v2203
    %v2341 = vpop.f32.mrb[0].mxu0
    %v2342 = vadd.f32 %v2209, %v2341
    %v2343 = vpop.f32.mrb[0].mxu0
    %v2344 = vpop.f32.mrb[0].mxu0
    %v2345 = vadd.f32 %v2209, %v2344
    %v2346 = vpop.f32.mrb[0].mxu0
    %2347 = vdwg.mxu0
    %2348 = vmax.xlane.f32.xlu0 %v2342
    %v2349 = vpop.xlane.xlu0 %2348
    %2350 = vmax.xlane.f32.xlu0 %v2345
    %v2351 = vpop.xlane.xlu0 %2350
    %v2352 = vsub.f32 %v2342, %v2349
    %v2353 = vsub.f32 %v2345, %v2351
    %v2354 = vmul.f32 %v2352, 1.442695
    %v2355 = vpow.pop %v2354
    %v2356 = vmul.f32 %v2353, 1.442695
    %v2357 = vpow.pop %v2356
    %2358 = vadd.xlane.f32.xlu0 %v2355
    %v2359 = vpop.xlane.xlu0 %2358
    %2360 = vadd.xlane.f32.xlu0 %v2357
    %v2361 = vpop.xlane.xlu0 %2360
    %v2362 = vlog2.pop %v2359
    %v2363 = vmul.f32 %v2362, 0.6931472
    %v2364 = vlog2.pop %v2361
    %v2365 = vmul.f32 %v2364, 0.6931472
    %v2366 = vsub.f32 %v2352, %v2363
    %v2367 = vsub.f32 %v2353, %v2365
    %2368 = vst [vmem:[#allocation10] sm:$0xff] %v2366
    %2369 = vst [vmem:[#allocation10 + $0x8] sm:$0xff] %v2367
    // Predicated region
    $region46: #{tpu_custom_call.1} parent=1 // pred_check
      _
    $region47: #{tpu_custom_call.1} parent=1 // pred_check_branch
      %2371 = sbr.rel (0) target = $region49
    $region48: #{tpu_custom_call.1} parent=1 // pred_region
      %s2373 = ssub.s32 256, 256
      %2374 = vsyncadd [#allocation4], %s2373
      %s2375 = sshll.u32 [#allocation10], 4
      %s2376 = int_to_ptr.vmem [resolvable:$true] %s2375
      %2381 = dma.vmem_to_hbm [thread:$0]  %s2376, 256, %s7, [#allocation4], 128, 128, 8
    $region49: #{tpu_custom_call.1} parent=1 // pred_fallthru
      _
    // Predicated region
    $region50: #{tpu_custom_call.1} parent=1 // pred_check
      _
    $region51: #{tpu_custom_call.1} parent=1 // pred_check_branch
      %2383 = sbr.rel (0) target = $region53
    $region52: #{tpu_custom_call.1} parent=1 // pred_region
      %2384 = dma.done [#allocation4], 256
    $region53: #{tpu_custom_call.1} parent=1 // pred_fallthru
      _
    %2385 = vsyncpa [#allocation3], 1
    %2386 = vsyncpa [#allocation6], 1
    %2387 = vsyncpa [#allocation9], 1
    %2388 = vsyncpa [#allocation4], 1

</llo_original>
